<compile_context>
chip_gen: v6e
topology: v6e:2x2x1
jax: 0.10.0
libtpu: 0.0.40
codegen_flags: <defaults>
</compile_context>

<pallas_src>
import math
from functools import lru_cache, partial

import numpy as np
import jax
import jax.numpy as jnp
from jax.experimental import pallas as pl

HEAD_PAD = 128   # lane-dense padded width per head output block (3 / 6 / 1 sliced later)
HEAD_HID = 256   # hidden width of each head MLP


# ----------------------------------------------------------------------------
# Fused forward kernel (single grid step, whole-array VMEM operands)
# ----------------------------------------------------------------------------

def _fused_forward_kernel(
    xp_ref, pe_ref, emb_w_ref,
    wqkv_ref, wo_ref,
    fw1_ref, fb1_ref, fw2_ref, fb2_ref,
    hw1_ref, hb1_ref, hw2_ref, hb2_ref,
    out_ref, *, B, S, D):
  f32, bf16 = jnp.float32, jnp.bfloat16
  N = B * S

  # ---- patch embedding (tiny K) + pooled positional encoding + folded emb bias ----
  tokens = (jnp.dot(xp_ref[...], emb_w_ref[...], preferred_element_type=f32)
            + pe_ref[...])                                           # (N, D) f32

  # ---- fused QKV projection: one (D, 3D) weight push ----
  t16 = tokens.astype(bf16)
  qkv = jnp.dot(t16, wqkv_ref[...], preferred_element_type=f32)      # (N, 3D)
  q = qkv[:, 0 * D:1 * D].astype(bf16)
  k = qkv[:, 1 * D:2 * D].astype(bf16)
  v = qkv[:, 2 * D:3 * D].astype(bf16)

  # ---- batched single-head attention with block-diagonal (per-batch) mask ----
  scale = 1.0 / math.sqrt(D)
  scores = jax.lax.dot_general(q, k, (((1,), (1,)), ((), ())),
                               preferred_element_type=f32) * scale   # (N, N)
  row = jax.lax.broadcasted_iota(jnp.int32, (N, N), 0)
  col = jax.lax.broadcasted_iota(jnp.int32, (N, N), 1)
  same_batch = None                 # compile-time unrolled (B tiny) -> pure VPU compares
  for b in range(B):
    blk = ((row >= b * S) & (row < (b + 1) * S)
           & (col >= b * S) & (col < (b + 1) * S))
    same_batch = blk if same_batch is None else (same_batch | blk)
  scores = jnp.where(same_batch, scores, -1e30)
  attn = jax.nn.softmax(scores, axis=-1)
  ctx = jnp.dot(attn.astype(bf16), v, preferred_element_type=f32)    # (N, D)

  y = tokens + jnp.dot(ctx.astype(bf16), wo_ref[...], preferred_element_type=f32)

  # ---- feed-forward + residual ----
  hf = jnp.maximum(
      jnp.dot(y.astype(bf16), fw1_ref[...], preferred_element_type=f32) + fb1_ref[...],
      0.0)
  emb = (y + jnp.dot(hf.astype(bf16), fw2_ref[...], preferred_element_type=f32)
         + fb2_ref[...])                                             # (N, D)

  # ---- fused heads on ALL tokens (redundant rows are free; M-util tiny either way) ----
  h1 = jnp.maximum(
      jnp.dot(emb.astype(bf16), hw1_ref[...], preferred_element_type=f32) + hb1_ref[...],
      0.0)                                                           # (N, 3*256)
  heads = (jnp.dot(h1.astype(bf16), hw2_ref[...], preferred_element_type=f32)
           + hb2_ref[...])                                           # (N, 3*128)
  # Sigmoid only on the gripper head's 128-lane block (padded lanes -> 0.5, sliced off).
  lane = jax.lax.broadcasted_iota(jnp.int32, heads.shape, 1)
  out_ref[...] = jnp.where(lane >= 2 * HEAD_PAD, jax.nn.sigmoid(heads), heads)


# ----------------------------------------------------------------------------
# Hoisted, HW-mean-pooled positional encoding (exact; host-side numpy, cached as numpy)
# ----------------------------------------------------------------------------

@lru_cache(maxsize=None)
def _pooled_pos_encoding_np(S, h, w, feat_dim):
  """HW-mean of the original pos_encoder(zeros, ..., S, h, w, ceil(D/3)) sliced to D."""
  C = int(np.ceil(feat_dim / 3))
  half = int(np.ceil(C / 2))
  grid_z = np.broadcast_to(np.linspace(0.0, S - 1, S).reshape(S, 1, 1), (S, h, w))
  grid_y = np.broadcast_to(np.linspace(0.0, h - 1, h).reshape(1, h, 1), (S, h, w))
  grid_x = np.broadcast_to(np.linspace(0.0, w - 1, w).reshape(1, 1, w), (S, h, w))
  div = np.exp(np.arange(0, C, 2, dtype=np.float32) * (-math.log(10000.0) / C))
  div = div.reshape(half, 1, 1, 1)

  def interleave(g):
    s = np.sin(g[None].astype(np.float32) * div)        # (half, S, h, w)
    c = np.cos(g[None].astype(np.float32) * div)
    out = np.zeros((2 * half, S, h, w), np.float32)
    out[0::2] = s
    out[1::2] = c
    return out

  pe = np.concatenate([interleave(grid_z), interleave(grid_y), interleave(grid_x)],
                      axis=0)                            # (6*half, S, h, w)
  pe = pe.transpose(1, 0, 2, 3)[:, :feat_dim]            # (S, D, h, w)
  return pe.mean(axis=(2, 3)).astype(np.float32)         # (S, D) numpy


# ----------------------------------------------------------------------------
# Parameters, one-time constant packing, and forward wrapper
# ----------------------------------------------------------------------------

def init_params(key, feat_dim, patch_dim, ffn_dim=256):
  ks = jax.random.split(key, 16)
  n = lambda k, shape, scale=0.02: scale * jax.random.normal(k, shape, dtype=jnp.float32)
  return {
      # patch-embedding stand-in for Embnet (resnet18)
      "emb_w": n(ks[0], (patch_dim, feat_dim)),
      "emb_b": n(ks[1], (feat_dim,)),
      # encoder layer stand-in for TransformerForecaster
      "wq": n(ks[2], (feat_dim, feat_dim)),
      "wk": n(ks[3], (feat_dim, feat_dim)),
      "wv": n(ks[4], (feat_dim, feat_dim)),
      "wo": n(ks[5], (feat_dim, feat_dim)),
      "ff_w1": n(ks[6], (feat_dim, ffn_dim)),
      "ff_b1": n(ks[7], (ffn_dim,)),
      "ff_w2": n(ks[8], (ffn_dim, feat_dim)),
      "ff_b2": n(ks[9], (feat_dim,)),
      # heads (exact structure from the module)
      "p_w1": n(ks[10], (feat_dim, HEAD_HID)), "p_b1": jnp.zeros((HEAD_HID,), jnp.float32),
      "p_w2": n(ks[11], (HEAD_HID, 3)),        "p_b2": jnp.zeros((3,), jnp.float32),
      "a_w1": n(ks[12], (feat_dim, HEAD_HID)), "a_b1": jnp.zeros((HEAD_HID,), jnp.float32),
      "a_w2": n(ks[13], (HEAD_HID, 6)),        "a_b2": jnp.zeros((6,), jnp.float32),
      "g_w1": n(ks[14], (feat_dim, HEAD_HID)), "g_b1": jnp.zeros((HEAD_HID,), jnp.float32),
      "g_w2": n(ks[15], (HEAD_HID, 1)),        "g_b2": jnp.zeros((1,), jnp.float32),
  }


def prepare_constants(params, B, S, h, w, feat_dim):
  """One-time packing/casting of weights into fused, lane-dense bf16 operands."""
  D = feat_dim
  bf16 = jnp.bfloat16

  pe = jnp.asarray(_pooled_pos_encoding_np(S, h, w, D))                  # (S, D)
  pe_bias = jnp.tile(pe, (B, 1)) + params["emb_b"][None, :]              # (B*S, D), emb_b folded in

  w_qkv = jnp.concatenate([params["wq"], params["wk"], params["wv"]],
                          axis=1).astype(bf16)                           # (D, 3D)

  hw1 = jnp.concatenate([params["p_w1"], params["a_w1"], params["g_w1"]],
                        axis=1).astype(bf16)                             # (D, 3*256)
  hb1 = jnp.concatenate([params["p_b1"], params["a_b1"], params["g_b1"]],
                        axis=0).reshape(1, -1)                           # (1, 768)

  # Block-diagonal, lane-padded second layers of the three heads -> (768, 384).
  hw2 = jnp.zeros((3 * HEAD_HID, 3 * HEAD_PAD), jnp.float32)
  hw2 = hw2.at[0 * HEAD_HID:1 * HEAD_HID, 0:3].set(params["p_w2"])
  hw2 = hw2.at[1 * HEAD_HID:2 * HEAD_HID, HEAD_PAD:HEAD_PAD + 6].set(params["a_w2"])
  hw2 = hw2.at[2 * HEAD_HID:3 * HEAD_HID, 2 * HEAD_PAD:2 * HEAD_PAD + 1].set(params["g_w2"])
  hb2 = jnp.zeros((1, 3 * HEAD_PAD), jnp.float32)
  hb2 = hb2.at[0, 0:3].set(params["p_b2"])
  hb2 = hb2.at[0, HEAD_PAD:HEAD_PAD + 6].set(params["a_b2"])
  hb2 = hb2.at[0, 2 * HEAD_PAD:2 * HEAD_PAD + 1].set(params["g_b2"])

  return {
      "emb_w": params["emb_w"],                  # f32 (P, D) - tiny K, kept f32
      "pe_bias": pe_bias,                        # f32 (B*S, D)
      "w_qkv": w_qkv,                            # bf16 (D, 3D)
      "wo": params["wo"].astype(bf16),
      "ff_w1": params["ff_w1"].astype(bf16),
      "ff_b1": params["ff_b1"].reshape(1, -1),
      "ff_w2": params["ff_w2"].astype(bf16),
      "ff_b2": params["ff_b2"].reshape(1, -1),
      "hw1": hw1, "hb1": hb1,
      "hw2": hw2.astype(bf16), "hb2": hb2,
  }


def denseattention_forward(const, imgs, *, feat_dim, patch=2, gripper=True):
  """imgs: (B, S, C, H, W) float32. Returns (pos (B,3), angle (B,6), g_pred (B,1))."""
  B, S, C, H, W = imgs.shape
  h, w = H // patch, W // patch
  P = C * patch * patch

  # Embnet stand-in: patchify, then mean over h*w (commutes exactly with the linear).
  x = imgs.reshape(B, S, C, h, patch, w, patch)
  x = x.transpose(0, 1, 3, 5, 2, 4, 6).reshape(B, S, h * w, P)
  x_pool = jnp.mean(x, axis=2).reshape(B * S, P)                        # (B*S, P)

  out_pad = pl.pallas_call(
      partial(_fused_forward_kernel, B=B, S=S, D=feat_dim),
      out_shape=jax.ShapeDtypeStruct((B * S, 3 * HEAD_PAD), jnp.float32),
  )(x_pool, const["pe_bias"], const["emb_w"],
    const["w_qkv"], const["wo"],
    const["ff_w1"], const["ff_b1"], const["ff_w2"], const["ff_b2"],
    const["hw1"], const["hb1"], const["hw2"], const["hb2"])

  out = out_pad.reshape(B, S, 3 * HEAD_PAD)
  pos = out[:, 0, 0:3]                                  # p_net(emb[:, 0])
  angle = out[:, 1, HEAD_PAD:HEAD_PAD + 6]              # dep_a6d_net(emb[:, 1])
  g_pred = (out[:, 2, 2 * HEAD_PAD:2 * HEAD_PAD + 1] if gripper
            else jnp.zeros((0,), jnp.float32))          # mirrors torch.tensor([])
  return pos, angle, g_pred


if __name__ == "__main__":
  # Small, self-consistent shapes: B=2, S=3 tokens (seq + goal + extra token so
  # emb[:, 2, :] exists for the gripper head), 3x14x14 RGB frames, feat_dim=128.
  B, S, C, H, W = 2, 3, 3, 14, 14
  feat_dim = 128
  patch = 2

  key = jax.random.PRNGKey(0)
  k_img, k_par = jax.random.split(key)
  imgs = jax.random.normal(k_img, (B, S, C, H, W), dtype=jnp.float32)
  params = init_params(k_par, feat_dim, patch_dim=C * patch * patch)

  # One-time weight packing / casting, outside the jitted per-call path.
  const = prepare_constants(params, B, S, H // patch, W // patch, feat_dim)
  const = jax.block_until_ready(const)

  fwd = jax.jit(partial(denseattention_forward,
                        feat_dim=feat_dim, patch=patch, gripper=True))
  pos, angle, g_pred = fwd(const, imgs)
  jax.block_until_ready((pos, angle, g_pred))

  assert pos.shape == (B, 3)
  assert angle.shape == (B, 6)
  assert g_pred.shape == (B, 1)
  assert bool(jnp.all(jnp.isfinite(pos))) and bool(jnp.all(jnp.isfinite(angle)))
  assert bool(jnp.all((g_pred >= 0.0) & (g_pred <= 1.0)))
  print("KERNEL_OK")
</pallas_src>

<mosaic_0001>
module attributes {stable_mosaic.version = 11 : i64} {
  func.func @_fused_forward_kernel(%arg0: memref<6x12xf32, #tpu.memory_space<vmem>>, %arg1: memref<6x128xf32, #tpu.memory_space<vmem>>, %arg2: memref<12x128xf32, #tpu.memory_space<vmem>>, %arg3: memref<128x384xbf16, #tpu.memory_space<vmem>>, %arg4: memref<128x128xbf16, #tpu.memory_space<vmem>>, %arg5: memref<128x256xbf16, #tpu.memory_space<vmem>>, %arg6: memref<1x256xf32, #tpu.memory_space<vmem>>, %arg7: memref<256x128xbf16, #tpu.memory_space<vmem>>, %arg8: memref<1x128xf32, #tpu.memory_space<vmem>>, %arg9: memref<128x768xbf16, #tpu.memory_space<vmem>>, %arg10: memref<1x768xf32, #tpu.memory_space<vmem>>, %arg11: memref<768x384xbf16, #tpu.memory_space<vmem>>, %arg12: memref<1x384xf32, #tpu.memory_space<vmem>>, %arg13: memref<6x384xf32, #tpu.memory_space<vmem>>) attributes {dimension_semantics = [], scalar_prefetch = 0 : i64, scratch_operands = 0 : i64, tpu.core_type = #tpu.core_type<tc>} {
    %c0 = arith.constant 0 : index
    %c0_0 = arith.constant 0 : index
    %0 = vector.load %arg0[%c0, %c0_0] : memref<6x12xf32, #tpu.memory_space<vmem>>, vector<6x12xf32>
    %c0_1 = arith.constant 0 : index
    %c0_2 = arith.constant 0 : index
    %1 = vector.load %arg2[%c0_1, %c0_2] : memref<12x128xf32, #tpu.memory_space<vmem>>, vector<12x128xf32>
    %cst = arith.constant dense<0.000000e+00> : vector<6x128xf32>
    %2 = tpu.matmul %0, %1, %cst {dimension_numbers = #tpu.dot_dimension_numbers<[1], [0], [0], [1], [0, 0, 1, 1], [], []>} : vector<6x12xf32>, vector<12x128xf32>, vector<6x128xf32> -> vector<6x128xf32>
    %c0_3 = arith.constant 0 : index
    %c0_4 = arith.constant 0 : index
    %3 = vector.load %arg1[%c0_3, %c0_4] : memref<6x128xf32, #tpu.memory_space<vmem>>, vector<6x128xf32>
    %4 = arith.addf %2, %3 : vector<6x128xf32>
    %5 = arith.truncf %4 : vector<6x128xf32> to vector<6x128xbf16>
    %c0_5 = arith.constant 0 : index
    %c0_6 = arith.constant 0 : index
    %6 = vector.load %arg3[%c0_5, %c0_6] : memref<128x384xbf16, #tpu.memory_space<vmem>>, vector<128x384xbf16>
    %cst_7 = arith.constant dense<0.000000e+00> : vector<6x384xf32>
    %7 = tpu.matmul %5, %6, %cst_7 {dimension_numbers = #tpu.dot_dimension_numbers<[1], [0], [0], [1], [0, 0, 1, 1], [], []>} : vector<6x128xbf16>, vector<128x384xbf16>, vector<6x384xf32> -> vector<6x384xf32>
    %8 = vector.extract_strided_slice %7 {offsets = [0, 0], sizes = [6, 128], strides = [1, 1]} : vector<6x384xf32> to vector<6x128xf32>
    %9 = arith.truncf %8 : vector<6x128xf32> to vector<6x128xbf16>
    %10 = vector.extract_strided_slice %7 {offsets = [0, 128], sizes = [6, 128], strides = [1, 1]} : vector<6x384xf32> to vector<6x128xf32>
    %11 = arith.truncf %10 : vector<6x128xf32> to vector<6x128xbf16>
    %12 = vector.extract_strided_slice %7 {offsets = [0, 256], sizes = [6, 128], strides = [1, 1]} : vector<6x384xf32> to vector<6x128xf32>
    %13 = arith.truncf %12 : vector<6x128xf32> to vector<6x128xbf16>
    %cst_8 = arith.constant dense<0.000000e+00> : vector<6x6xf32>
    %14 = tpu.matmul %9, %11, %cst_8 {dimension_numbers = #tpu.dot_dimension_numbers<[1], [1], [0], [0], [0, 0, 1, 0], [], []>} : vector<6x128xbf16>, vector<6x128xbf16>, vector<6x6xf32> -> vector<6x6xf32>
    %cst_9 = arith.constant 0.0883883461 : f32
    %15 = vector.broadcast %cst_9 : f32 to vector<6x6xf32>
    %16 = arith.mulf %14, %15 : vector<6x6xf32>
    %17 = tpu.iota {dimensions = array<i32: 0>} : vector<6x6xi32>
    %18 = tpu.iota {dimensions = array<i32: 1>} : vector<6x6xi32>
    %c0_i32 = arith.constant 0 : i32
    %19 = vector.broadcast %c0_i32 : i32 to vector<6x6xi32>
    %20 = arith.cmpi sge, %17, %19 : vector<6x6xi32>
    %c3_i32 = arith.constant 3 : i32
    %21 = vector.broadcast %c3_i32 : i32 to vector<6x6xi32>
    %22 = arith.cmpi slt, %17, %21 : vector<6x6xi32>
    %23 = arith.andi %20, %22 : vector<6x6xi1>
    %c0_i32_10 = arith.constant 0 : i32
    %24 = vector.broadcast %c0_i32_10 : i32 to vector<6x6xi32>
    %25 = arith.cmpi sge, %18, %24 : vector<6x6xi32>
    %26 = arith.andi %23, %25 : vector<6x6xi1>
    %c3_i32_11 = arith.constant 3 : i32
    %27 = vector.broadcast %c3_i32_11 : i32 to vector<6x6xi32>
    %28 = arith.cmpi slt, %18, %27 : vector<6x6xi32>
    %29 = arith.andi %26, %28 : vector<6x6xi1>
    %c3_i32_12 = arith.constant 3 : i32
    %30 = vector.broadcast %c3_i32_12 : i32 to vector<6x6xi32>
    %31 = arith.cmpi sge, %17, %30 : vector<6x6xi32>
    %c6_i32 = arith.constant 6 : i32
    %32 = vector.broadcast %c6_i32 : i32 to vector<6x6xi32>
    %33 = arith.cmpi slt, %17, %32 : vector<6x6xi32>
    %34 = arith.andi %31, %33 : vector<6x6xi1>
    %c3_i32_13 = arith.constant 3 : i32
    %35 = vector.broadcast %c3_i32_13 : i32 to vector<6x6xi32>
    %36 = arith.cmpi sge, %18, %35 : vector<6x6xi32>
    %37 = arith.andi %34, %36 : vector<6x6xi1>
    %c6_i32_14 = arith.constant 6 : i32
    %38 = vector.broadcast %c6_i32_14 : i32 to vector<6x6xi32>
    %39 = arith.cmpi slt, %18, %38 : vector<6x6xi32>
    %40 = arith.andi %37, %39 : vector<6x6xi1>
    %41 = arith.ori %29, %40 : vector<6x6xi1>
    %cst_15 = arith.constant -1.000000e+30 : f32
    %42 = vector.broadcast %cst_15 : f32 to vector<6x6xf32>
    %43 = arith.select %41, %16, %42 : vector<6x6xi1>, vector<6x6xf32>
    %cst_16 = arith.constant dense<0xFF800000> : vector<6xf32>
    %44 = vector.multi_reduction <maximumf>, %43, %cst_16 [1] : vector<6x6xf32> to vector<6xf32>
    %cst_17 = arith.constant 0xFF800000 : f32
    %45 = vector.broadcast %cst_17 : f32 to vector<6xf32>
    %46 = arith.maximumf %45, %44 : vector<6xf32>
    %47 = vector.shape_cast %46 : vector<6xf32> to vector<6x1xf32>
    %48 = vector.broadcast %47 : vector<6x1xf32> to vector<6x6xf32>
    %49 = arith.subf %43, %48 : vector<6x6xf32>
    %50 = math.exp %49 : vector<6x6xf32>
    %cst_18 = arith.constant dense<0.000000e+00> : vector<6xf32>
    %51 = vector.multi_reduction <add>, %50, %cst_18 [1] : vector<6x6xf32> to vector<6xf32>
    %52 = vector.shape_cast %51 : vector<6xf32> to vector<6x1xf32>
    %53 = vector.broadcast %52 : vector<6x1xf32> to vector<6x6xf32>
    %54 = arith.divf %50, %53 : vector<6x6xf32>
    %55 = arith.truncf %54 : vector<6x6xf32> to vector<6x6xbf16>
    %cst_19 = arith.constant dense<0.000000e+00> : vector<6x128xf32>
    %56 = tpu.matmul %55, %13, %cst_19 {dimension_numbers = #tpu.dot_dimension_numbers<[1], [0], [0], [1], [0, 0, 1, 1], [], []>} : vector<6x6xbf16>, vector<6x128xbf16>, vector<6x128xf32> -> vector<6x128xf32>
    %57 = arith.truncf %56 : vector<6x128xf32> to vector<6x128xbf16>
    %c0_20 = arith.constant 0 : index
    %c0_21 = arith.constant 0 : index
    %58 = vector.load %arg4[%c0_20, %c0_21] : memref<128x128xbf16, #tpu.memory_space<vmem>>, vector<128x128xbf16>
    %cst_22 = arith.constant dense<0.000000e+00> : vector<6x128xf32>
    %59 = tpu.matmul %57, %58, %cst_22 {dimension_numbers = #tpu.dot_dimension_numbers<[1], [0], [0], [1], [0, 0, 1, 1], [], []>} : vector<6x128xbf16>, vector<128x128xbf16>, vector<6x128xf32> -> vector<6x128xf32>
    %60 = arith.addf %4, %59 : vector<6x128xf32>
    %61 = arith.truncf %60 : vector<6x128xf32> to vector<6x128xbf16>
    %c0_23 = arith.constant 0 : index
    %c0_24 = arith.constant 0 : index
    %62 = vector.load %arg5[%c0_23, %c0_24] : memref<128x256xbf16, #tpu.memory_space<vmem>>, vector<128x256xbf16>
    %cst_25 = arith.constant dense<0.000000e+00> : vector<6x256xf32>
    %63 = tpu.matmul %61, %62, %cst_25 {dimension_numbers = #tpu.dot_dimension_numbers<[1], [0], [0], [1], [0, 0, 1, 1], [], []>} : vector<6x128xbf16>, vector<128x256xbf16>, vector<6x256xf32> -> vector<6x256xf32>
    %c0_26 = arith.constant 0 : index
    %c0_27 = arith.constant 0 : index
    %64 = vector.load %arg6[%c0_26, %c0_27] : memref<1x256xf32, #tpu.memory_space<vmem>>, vector<1x256xf32>
    %65 = vector.broadcast %64 : vector<1x256xf32> to vector<6x256xf32>
    %66 = arith.addf %63, %65 : vector<6x256xf32>
    %cst_28 = arith.constant 0.000000e+00 : f32
    %67 = vector.broadcast %cst_28 : f32 to vector<6x256xf32>
    %68 = arith.maximumf %66, %67 : vector<6x256xf32>
    %69 = arith.truncf %68 : vector<6x256xf32> to vector<6x256xbf16>
    %c0_29 = arith.constant 0 : index
    %c0_30 = arith.constant 0 : index
    %70 = vector.load %arg7[%c0_29, %c0_30] : memref<256x128xbf16, #tpu.memory_space<vmem>>, vector<256x128xbf16>
    %cst_31 = arith.constant dense<0.000000e+00> : vector<6x128xf32>
    %71 = tpu.matmul %69, %70, %cst_31 {dimension_numbers = #tpu.dot_dimension_numbers<[1], [0], [0], [1], [0, 0, 1, 1], [], []>} : vector<6x256xbf16>, vector<256x128xbf16>, vector<6x128xf32> -> vector<6x128xf32>
    %72 = arith.addf %60, %71 : vector<6x128xf32>
    %c0_32 = arith.constant 0 : index
    %c0_33 = arith.constant 0 : index
    %73 = vector.load %arg8[%c0_32, %c0_33] : memref<1x128xf32, #tpu.memory_space<vmem>>, vector<1x128xf32>
    %74 = vector.broadcast %73 : vector<1x128xf32> to vector<6x128xf32>
    %75 = arith.addf %72, %74 : vector<6x128xf32>
    %76 = arith.truncf %75 : vector<6x128xf32> to vector<6x128xbf16>
    %c0_34 = arith.constant 0 : index
    %c0_35 = arith.constant 0 : index
    %77 = vector.load %arg9[%c0_34, %c0_35] : memref<128x768xbf16, #tpu.memory_space<vmem>>, vector<128x768xbf16>
    %cst_36 = arith.constant dense<0.000000e+00> : vector<6x768xf32>
    %78 = tpu.matmul %76, %77, %cst_36 {dimension_numbers = #tpu.dot_dimension_numbers<[1], [0], [0], [1], [0, 0, 1, 1], [], []>} : vector<6x128xbf16>, vector<128x768xbf16>, vector<6x768xf32> -> vector<6x768xf32>
    %c0_37 = arith.constant 0 : index
    %c0_38 = arith.constant 0 : index
    %79 = vector.load %arg10[%c0_37, %c0_38] : memref<1x768xf32, #tpu.memory_space<vmem>>, vector<1x768xf32>
    %80 = vector.broadcast %79 : vector<1x768xf32> to vector<6x768xf32>
    %81 = arith.addf %78, %80 : vector<6x768xf32>
    %cst_39 = arith.constant 0.000000e+00 : f32
    %82 = vector.broadcast %cst_39 : f32 to vector<6x768xf32>
    %83 = arith.maximumf %81, %82 : vector<6x768xf32>
    %84 = arith.truncf %83 : vector<6x768xf32> to vector<6x768xbf16>
    %c0_40 = arith.constant 0 : index
    %c0_41 = arith.constant 0 : index
    %85 = vector.load %arg11[%c0_40, %c0_41] : memref<768x384xbf16, #tpu.memory_space<vmem>>, vector<768x384xbf16>
    %cst_42 = arith.constant dense<0.000000e+00> : vector<6x384xf32>
    %86 = tpu.matmul %84, %85, %cst_42 {dimension_numbers = #tpu.dot_dimension_numbers<[1], [0], [0], [1], [0, 0, 1, 1], [], []>} : vector<6x768xbf16>, vector<768x384xbf16>, vector<6x384xf32> -> vector<6x384xf32>
    %c0_43 = arith.constant 0 : index
    %c0_44 = arith.constant 0 : index
    %87 = vector.load %arg12[%c0_43, %c0_44] : memref<1x384xf32, #tpu.memory_space<vmem>>, vector<1x384xf32>
    %88 = vector.broadcast %87 : vector<1x384xf32> to vector<6x384xf32>
    %89 = arith.addf %86, %88 : vector<6x384xf32>
    %90 = tpu.iota {dimensions = array<i32: 1>} : vector<6x384xi32>
    %c256_i32 = arith.constant 256 : i32
    %91 = vector.broadcast %c256_i32 : i32 to vector<6x384xi32>
    %92 = arith.cmpi sge, %90, %91 : vector<6x384xi32>
    %93 = arith.negf %89 : vector<6x384xf32>
    %94 = math.exp %93 : vector<6x384xf32>
    %cst_45 = arith.constant 1.000000e+00 : f32
    %95 = vector.broadcast %cst_45 : f32 to vector<6x384xf32>
    %96 = arith.addf %95, %94 : vector<6x384xf32>
    %97 = arith.divf %95, %96 : vector<6x384xf32>
    %98 = arith.select %92, %97, %89 : vector<6x384xi1>, vector<6x384xf32>
    %c0_46 = arith.constant 0 : index
    %c0_47 = arith.constant 0 : index
    %99 = vector.load %arg13[%c0_46, %c0_47] : memref<6x384xf32, #tpu.memory_space<vmem>>, vector<6x384xf32>
    tpu.vector_store %arg13[%c0_46, %c0_47], %98 {strides = array<i32>} : memref<6x384xf32, #tpu.memory_space<vmem>>, vector<6x384xf32>,
    return
  }
}

</mosaic_0001>

<llo_original>
// kernel: denseattention_forward.1
$region0: #{denseattention_forward.1}
  #allocation0 [shape = 'u32[]', space=smem, size = 0x4, offset = 0x4, fixed_abs, tag = 'smem constant byte address 0x4 - core index']
  #allocation1 [shape = 'u32[144,128]{1,0:T(1,128)}', space=vmem, size = 0x12000, scoped, tag = 'internal scratch']
  %s0 = inlined_call_operand.vmem [shape: f32[6,12], index: 0, kind: input, shape index: {}]
  %s1 = inlined_call_operand.vmem [shape: f32[6,128], index: 1, kind: input, shape index: {}]
  %s2 = inlined_call_operand.vmem [shape: f32[12,128], index: 2, kind: input, shape index: {}]
  %s3 = inlined_call_operand.vmem [shape: bf16[128,384], index: 3, kind: input, shape index: {}]
  %s4 = inlined_call_operand.vmem [shape: bf16[128,128], index: 4, kind: input, shape index: {}]
  %s5 = inlined_call_operand.vmem [shape: bf16[128,256], index: 5, kind: input, shape index: {}]
  %s6 = inlined_call_operand.vmem [shape: f32[1,256], index: 6, kind: input, shape index: {}]
  %s7 = inlined_call_operand.vmem [shape: bf16[256,128], index: 7, kind: input, shape index: {}]
  %s8 = inlined_call_operand.vmem [shape: f32[1,128], index: 8, kind: input, shape index: {}]
  %s9 = inlined_call_operand.vmem [shape: bf16[128,768], index: 9, kind: input, shape index: {}]
  %s10 = inlined_call_operand.vmem [shape: f32[1,768], index: 10, kind: input, shape index: {}]
  %s11 = inlined_call_operand.vmem [shape: bf16[768,384], index: 11, kind: input, shape index: {}]
  %s12 = inlined_call_operand.vmem [shape: f32[1,384], index: 12, kind: input, shape index: {}]
  %s13 = inlined_call_operand.vmem [shape: f32[6,384], index: 13, kind: output, shape index: {}]
  %s14 = sld [smem:[#allocation0]]
  $region62: #{denseattention_forward.1} parent=0
    _
  %s16 = ssub.s32 1, %s14
  %s17 = scalar_select 0, %s16, %s14
  // Predicated region
  $region2: #{denseattention_forward.1} parent=0 // pred_check
    _
  $region3: #{denseattention_forward.1} parent=0 // pred_check_branch
    %19 = sbr.rel (0) target = $region5
  $region4: #{denseattention_forward.1} parent=0 // pred_region
    _
  $region5: #{denseattention_forward.1} parent=0 // pred_fallthru
    _
  // Predicated region
  $region6: #{denseattention_forward.1} parent=0 // pred_check
    _
  $region7: #{denseattention_forward.1} parent=0 // pred_check_branch
    %21 = sbr.rel (0) target = $region9
  $region8: #{denseattention_forward.1} parent=0 // pred_region
    _
  $region9: #{denseattention_forward.1} parent=0 // pred_fallthru
    _
  // Predicated region
  $region10: #{denseattention_forward.1} parent=0 // pred_check
    _
  $region11: #{denseattention_forward.1} parent=0 // pred_check_branch
    %23 = sbr.rel (0) target = $region13
  $region12: #{denseattention_forward.1} parent=0 // pred_region
    _
  $region13: #{denseattention_forward.1} parent=0 // pred_fallthru
    _
  // Predicated region
  $region14: #{denseattention_forward.1} parent=0 // pred_check
    _
  $region15: #{denseattention_forward.1} parent=0 // pred_check_branch
    %25 = sbr.rel (0) target = $region17
  $region16: #{denseattention_forward.1} parent=0 // pred_region
    _
  $region17: #{denseattention_forward.1} parent=0 // pred_fallthru
    _
  // Predicated region
  $region18: #{denseattention_forward.1} parent=0 // pred_check
    _
  $region19: #{denseattention_forward.1} parent=0 // pred_check_branch
    %27 = sbr.rel (0) target = $region21
  $region20: #{denseattention_forward.1} parent=0 // pred_region
    _
  $region21: #{denseattention_forward.1} parent=0 // pred_fallthru
    _
  // Predicated region
  $region22: #{denseattention_forward.1} parent=0 // pred_check
    _
  $region23: #{denseattention_forward.1} parent=0 // pred_check_branch
    %29 = sbr.rel (0) target = $region25
  $region24: #{denseattention_forward.1} parent=0 // pred_region
    _
  $region25: #{denseattention_forward.1} parent=0 // pred_fallthru
    _
  // Predicated region
  $region26: #{denseattention_forward.1} parent=0 // pred_check
    _
  $region27: #{denseattention_forward.1} parent=0 // pred_check_branch
    %31 = sbr.rel (0) target = $region29
  $region28: #{denseattention_forward.1} parent=0 // pred_region
    _
  $region29: #{denseattention_forward.1} parent=0 // pred_fallthru
    _
  // Predicated region
  $region30: #{denseattention_forward.1} parent=0 // pred_check
    _
  $region31: #{denseattention_forward.1} parent=0 // pred_check_branch
    %33 = sbr.rel (0) target = $region33
  $region32: #{denseattention_forward.1} parent=0 // pred_region
    _
  $region33: #{denseattention_forward.1} parent=0 // pred_fallthru
    _
  // Predicated region
  $region34: #{denseattention_forward.1} parent=0 // pred_check
    _
  $region35: #{denseattention_forward.1} parent=0 // pred_check_branch
    %35 = sbr.rel (0) target = $region37
  $region36: #{denseattention_forward.1} parent=0 // pred_region
    _
  $region37: #{denseattention_forward.1} parent=0 // pred_fallthru
    _
  // Predicated region
  $region38: #{denseattention_forward.1} parent=0 // pred_check
    _
  $region39: #{denseattention_forward.1} parent=0 // pred_check_branch
    %37 = sbr.rel (0) target = $region41
  $region40: #{denseattention_forward.1} parent=0 // pred_region
    _
  $region41: #{denseattention_forward.1} parent=0 // pred_fallthru
    _
  // Predicated region
  $region42: #{denseattention_forward.1} parent=0 // pred_check
    _
  $region43: #{denseattention_forward.1} parent=0 // pred_check_branch
    %39 = sbr.rel (0) target = $region45
  $region44: #{denseattention_forward.1} parent=0 // pred_region
    _
  $region45: #{denseattention_forward.1} parent=0 // pred_fallthru
    _
  // Predicated region
  $region46: #{denseattention_forward.1} parent=0 // pred_check
    _
  $region47: #{denseattention_forward.1} parent=0 // pred_check_branch
    %41 = sbr.rel (0) target = $region49
  $region48: #{denseattention_forward.1} parent=0 // pred_region
    _
  $region49: #{denseattention_forward.1} parent=0 // pred_fallthru
    _
  // Predicated region
  $region50: #{denseattention_forward.1} parent=0 // pred_check
    _
  $region51: #{denseattention_forward.1} parent=0 // pred_check_branch
    %43 = sbr.rel (0) target = $region53
  $region52: #{denseattention_forward.1} parent=0 // pred_region
    _
  $region53: #{denseattention_forward.1} parent=0 // pred_fallthru
    _
  %v45 = vld [vmem:[%s0] sm:$0x3f]
  %v46 = vld [vmem:[%s2] sm:$0xff]
  %v47 = vld [vmem:[%s2 + $0x8] sm:$0xf]
  %v48 = vld [vmem:[%s1] sm:$0x3f]
  %vm49 = vcmask 97280
  %v51 = vsel %vm49, %v45, 0
  %vm53 = vcmask 1043456
  %v55 = vsel %vm53, %v47, 0
  %57 = vmatprep.subr.mxu0 0.0
  %58 = vmatpush1.msra.mxu0 0.0
  %59 = vmatprep.subr.mxu0 0.0
  %60 = vmatpush1.msra.mxu0 0.0
  %61 = vmatprep.subr.mxu0 0.0
  %62 = vmatpush1.msra.mxu0 0.0
  %63 = vmatprep.subr.mxu0 0.0
  %64 = vmatpush1.msra.mxu0 0.0
  %65 = vmatprep.subr.mxu0 0.0
  %66 = vmatpush1.msra.mxu0 0.0
  %67 = vmatprep.subr.mxu0 0.0
  %68 = vmatpush1.msra.mxu0 0.0
  %69 = vmatprep.subr.mxu0 0.0
  %70 = vmatpush1.msra.mxu0 0.0
  %71 = vmatprep.subr.mxu0 0.0
  %72 = vmatpush1.msra.mxu0 0.0
  %73 = vmatprep.subr.mxu0 0.0
  %74 = vmatpush1.msra.mxu0 0.0
  %75 = vmatprep.subr.mxu0 0.0
  %76 = vmatpush1.msra.mxu0 0.0
  %77 = vmatprep.subr.mxu0 0.0
  %78 = vmatpush1.msra.mxu0 0.0
  %79 = vmatprep.subr.mxu0 0.0
  %80 = vmatpush1.msra.mxu0 0.0
  %81 = vmatprep.subr.mxu0 0.0
  %82 = vmatpush1.msra.mxu0 0.0
  %83 = vmatprep.subr.mxu0 0.0
  %84 = vmatpush1.msra.mxu0 0.0
  %85 = vmatprep.subr.mxu0 0.0
  %86 = vmatpush1.msra.mxu0 %v55
  %87 = vmatprep.subr.mxu0 0.0
  %88 = vmatpush1.msra.mxu0 %v46
  %89 = vmatprep.subr.mxu0 0.0
  %90 = vmatpush2.msra.mxu0 0.0
  %91 = vmatprep.subr.mxu0 0.0
  %92 = vmatpush2.msra.mxu0 0.0
  %93 = vmatprep.subr.mxu0 0.0
  %94 = vmatpush2.msra.mxu0 0.0
  %95 = vmatprep.subr.mxu0 0.0
  %96 = vmatpush2.msra.mxu0 0.0
  %97 = vmatprep.subr.mxu0 0.0
  %98 = vmatpush2.msra.mxu0 0.0
  %99 = vmatprep.subr.mxu0 0.0
  %100 = vmatpush2.msra.mxu0 0.0
  %101 = vmatprep.subr.mxu0 0.0
  %102 = vmatpush2.msra.mxu0 0.0
  %103 = vmatprep.subr.mxu0 0.0
  %104 = vmatpush2.msra.mxu0 0.0
  %105 = vmatprep.subr.mxu0 0.0
  %106 = vmatpush2.msra.mxu0 0.0
  %107 = vmatprep.subr.mxu0 0.0
  %108 = vmatpush2.msra.mxu0 0.0
  %109 = vmatprep.subr.mxu0 0.0
  %110 = vmatpush2.msra.mxu0 0.0
  %111 = vmatprep.subr.mxu0 0.0
  %112 = vmatpush2.msra.mxu0 0.0
  %113 = vmatprep.subr.mxu0 0.0
  %114 = vmatpush2.msra.mxu0 0.0
  %115 = vmatprep.subr.mxu0 0.0
  %116 = vmatpush2.msra.mxu0 0.0
  %117 = vmatprep.subr.mxu0 0.0
  %118 = vmatpush2.msra.mxu0 0.0
  %119 = vmatprep.subr.mxu0 0.0
  %120 = vmatpush2.msra.mxu0 0.0
  %121 = vmatprep.mubr.f32.mxu0 0.0
  %122 = vmatmul.mubr.f32.gmra.mxu0 %v51
  %v123 = vpop.f32.mrf.mxu0
  %v124 = vadd.f32 %v48, %v123
  %v125 = vpop.f32.mrf.mxu0
  %126 = vdwg.mxu0
  %v127 = vpack.c.bf16 %v124, %v124
  %v128 = vld [vmem:[%s3] sm:$0xff]
  %v129 = vld [vmem:[%s3 + $0x8] sm:$0xf]
  %v130 = vld [vmem:[%s3 + $0xc] sm:$0xff]
  %v131 = vld [vmem:[%s3 + $0x14] sm:$0xf]
  %v132 = vld [vmem:[%s3 + $0x18] sm:$0xff]
  %v133 = vld [vmem:[%s3 + $0x20] sm:$0xf]
  %v134 = vld [vmem:[%s3 + $0x24] sm:$0xff]
  %v135 = vld [vmem:[%s3 + $0x2c] sm:$0xf]
  %v136 = vld [vmem:[%s3 + $0x30] sm:$0xff]
  %v137 = vld [vmem:[%s3 + $0x38] sm:$0xf]
  %v138 = vld [vmem:[%s3 + $0x3c] sm:$0xff]
  %v139 = vld [vmem:[%s3 + $0x44] sm:$0xf]
  %v140 = vld [vmem:[%s3 + $0x48] sm:$0xff]
  %v141 = vld [vmem:[%s3 + $0x50] sm:$0xf]
  %v142 = vld [vmem:[%s3 + $0x54] sm:$0xff]
  %v143 = vld [vmem:[%s3 + $0x5c] sm:$0xf]
  %v144 = vld [vmem:[%s3 + $0x60] sm:$0xff]
  %v145 = vld [vmem:[%s3 + $0x68] sm:$0xf]
  %v146 = vld [vmem:[%s3 + $0x6c] sm:$0xff]
  %v147 = vld [vmem:[%s3 + $0x74] sm:$0xf]
  %v148 = vld [vmem:[%s3 + $0x78] sm:$0xff]
  %v149 = vld [vmem:[%s3 + $0x80] sm:$0xf]
  %v150 = vld [vmem:[%s3 + $0x84] sm:$0xff]
  %v151 = vld [vmem:[%s3 + $0x8c] sm:$0xf]
  %v152 = vld [vmem:[%s3 + $0x90] sm:$0xff]
  %v153 = vld [vmem:[%s3 + $0x98] sm:$0xf]
  %v154 = vld [vmem:[%s3 + $0x9c] sm:$0xff]
  %v155 = vld [vmem:[%s3 + $0xa4] sm:$0xf]
  %v156 = vld [vmem:[%s3 + $0xa8] sm:$0xff]
  %v157 = vld [vmem:[%s3 + $0xb0] sm:$0xf]
  %v158 = vld [vmem:[%s3 + $0xb4] sm:$0xff]
  %v159 = vld [vmem:[%s3 + $0xbc] sm:$0xf]
  %v192 = vunpack.c.l.b16 %v128
  %v193 = vunpack.c.h.b16 %v128
  %v194 = vunpack.c.l.b16 %v129
  %v195 = vunpack.c.l.b16 %v130
  %v196 = vunpack.c.h.b16 %v130
  %v197 = vunpack.c.l.b16 %v131
  %v198 = vunpack.c.l.b16 %v132
  %v199 = vunpack.c.h.b16 %v132
  %v200 = vunpack.c.l.b16 %v133
  %v201 = vunpack.c.l.b16 %v134
  %v202 = vunpack.c.h.b16 %v134
  %v203 = vunpack.c.l.b16 %v135
  %v204 = vunpack.c.l.b16 %v136
  %v205 = vunpack.c.h.b16 %v136
  %v206 = vunpack.c.l.b16 %v137
  %v207 = vunpack.c.l.b16 %v138
  %v208 = vunpack.c.h.b16 %v138
  %v209 = vunpack.c.l.b16 %v139
  %v210 = vunpack.c.l.b16 %v140
  %v211 = vunpack.c.h.b16 %v140
  %v212 = vunpack.c.l.b16 %v141
  %v213 = vunpack.c.l.b16 %v142
  %v214 = vunpack.c.h.b16 %v142
  %v215 = vunpack.c.l.b16 %v143
  %v216 = vunpack.c.l.b16 %v144
  %v217 = vunpack.c.h.b16 %v144
  %v218 = vunpack.c.l.b16 %v145
  %v219 = vunpack.c.l.b16 %v146
  %v220 = vunpack.c.h.b16 %v146
  %v221 = vunpack.c.l.b16 %v147
  %v222 = vunpack.c.l.b16 %v148
  %v223 = vunpack.c.h.b16 %v148
  %v224 = vunpack.c.l.b16 %v149
  %v225 = vunpack.c.l.b16 %v150
  %v226 = vunpack.c.h.b16 %v150
  %v227 = vunpack.c.l.b16 %v151
  %v228 = vunpack.c.l.b16 %v152
  %v229 = vunpack.c.h.b16 %v152
  %v230 = vunpack.c.l.b16 %v153
  %v231 = vunpack.c.l.b16 %v154
  %v232 = vunpack.c.h.b16 %v154
  %v233 = vunpack.c.l.b16 %v155
  %v234 = vunpack.c.l.b16 %v156
  %v235 = vunpack.c.h.b16 %v156
  %v236 = vunpack.c.l.b16 %v157
  %v237 = vunpack.c.l.b16 %v158
  %v238 = vunpack.c.h.b16 %v158
  %v239 = vunpack.c.l.b16 %v159
  %v240 = vpack.c.b16 %v195, %v192
  %v241 = vpack.c.b16 %v196, %v193
  %v242 = vpack.c.b16 %v197, %v194
  %v243 = vpack.c.b16 %v201, %v198
  %v244 = vpack.c.b16 %v202, %v199
  %v245 = vpack.c.b16 %v203, %v200
  %v246 = vpack.c.b16 %v207, %v204
  %v247 = vpack.c.b16 %v208, %v205
  %v248 = vpack.c.b16 %v209, %v206
  %v249 = vpack.c.b16 %v213, %v210
  %v250 = vpack.c.b16 %v214, %v211
  %v251 = vpack.c.b16 %v215, %v212
  %v252 = vpack.c.b16 %v219, %v216
  %v253 = vpack.c.b16 %v220, %v217
  %v254 = vpack.c.b16 %v221, %v218
  %v255 = vpack.c.b16 %v225, %v222
  %v256 = vpack.c.b16 %v226, %v223
  %v257 = vpack.c.b16 %v227, %v224
  %v258 = vpack.c.b16 %v231, %v228
  %v259 = vpack.c.b16 %v232, %v229
  %v260 = vpack.c.b16 %v233, %v230
  %v261 = vpack.c.b16 %v237, %v234
  %v262 = vpack.c.b16 %v238, %v235
  %v263 = vpack.c.b16 %v239, %v236
  %288 = vmatprep.subr.bf16.mxu0 %v262
  %289 = vmatpush1.bf16.msra.mxu0 %v261
  %290 = vmatprep.subr.bf16.mxu0 %v259
  %291 = vmatpush1.bf16.msra.mxu0 %v258
  %292 = vmatprep.subr.bf16.mxu0 %v256
  %293 = vmatpush1.bf16.msra.mxu0 %v255
  %294 = vmatprep.subr.bf16.mxu0 %v253
  %295 = vmatpush1.bf16.msra.mxu0 %v252
  %296 = vmatprep.subr.bf16.mxu0 %v250
  %297 = vmatpush1.bf16.msra.mxu0 %v249
  %298 = vmatprep.subr.bf16.mxu0 %v247
  %299 = vmatpush1.bf16.msra.mxu0 %v246
  %300 = vmatprep.subr.bf16.mxu0 %v244
  %301 = vmatpush1.bf16.msra.mxu0 %v243
  %302 = vmatprep.subr.bf16.mxu0 %v241
  %303 = vmatpush1.bf16.msra.mxu0 %v240
  %304 = vmatprep.subr.bf16.mxu0 0
  %305 = vmatpush2.bf16.msra.mxu0 0
  %306 = vmatprep.subr.bf16.mxu0 0
  %307 = vmatpush2.bf16.msra.mxu0 0
  %308 = vmatprep.subr.bf16.mxu0 0
  %309 = vmatpush2.bf16.msra.mxu0 0
  %310 = vmatprep.subr.bf16.mxu0 0
  %311 = vmatpush2.bf16.msra.mxu0 0
  %312 = vmatprep.subr.bf16.mxu0 0
  %313 = vmatpush2.bf16.msra.mxu0 0
  %314 = vmatprep.subr.bf16.mxu0 0
  %315 = vmatpush2.bf16.msra.mxu0 0
  %316 = vmatprep.subr.bf16.mxu0 0
  %317 = vmatpush2.bf16.msra.mxu0 0
  %318 = vmatprep.subr.bf16.mxu0 0
  %319 = vmatpush2.bf16.msra.mxu0 0
  %320 = vmatprep.mubr.bf16.mxu0 0
  %321 = vmatmul.mubr.bf16.gmra.mxu0 %v127
  %v322 = vpop.f32.mrf.mxu0
  %v323 = vadd.f32 0.0, %v322
  %v324 = vpop.f32.mrf.mxu0
  %v325 = vadd.f32 0.0, %v324
  %v326 = vpop.f32.mrf.mxu0
  %v327 = vpop.f32.mrf.mxu0
  %328 = vdwg.mxu0
  %329 = vmatprep.subr.bf16.mxu0 0
  %330 = vmatpush1.bf16.msra.mxu0 %v263
  %331 = vmatprep.subr.bf16.mxu0 0
  %332 = vmatpush1.bf16.msra.mxu0 %v260
  %333 = vmatprep.subr.bf16.mxu0 0
  %334 = vmatpush1.bf16.msra.mxu0 %v257
  %335 = vmatprep.subr.bf16.mxu0 0
  %336 = vmatpush1.bf16.msra.mxu0 %v254
  %337 = vmatprep.subr.bf16.mxu0 0
  %338 = vmatpush1.bf16.msra.mxu0 %v251
  %339 = vmatprep.subr.bf16.mxu0 0
  %340 = vmatpush1.bf16.msra.mxu0 %v248
  %341 = vmatprep.subr.bf16.mxu0 0
  %342 = vmatpush1.bf16.msra.mxu0 %v245
  %343 = vmatprep.subr.bf16.mxu0 0
  %344 = vmatpush1.bf16.msra.mxu0 %v242
  %345 = vmatprep.subr.bf16.mxu0 0
  %346 = vmatpush2.bf16.msra.mxu0 0
  %347 = vmatprep.subr.bf16.mxu0 0
  %348 = vmatpush2.bf16.msra.mxu0 0
  %349 = vmatprep.subr.bf16.mxu0 0
  %350 = vmatpush2.bf16.msra.mxu0 0
  %351 = vmatprep.subr.bf16.mxu0 0
  %352 = vmatpush2.bf16.msra.mxu0 0
  %353 = vmatprep.subr.bf16.mxu0 0
  %354 = vmatpush2.bf16.msra.mxu0 0
  %355 = vmatprep.subr.bf16.mxu0 0
  %356 = vmatpush2.bf16.msra.mxu0 0
  %357 = vmatprep.subr.bf16.mxu0 0
  %358 = vmatpush2.bf16.msra.mxu0 0
  %359 = vmatprep.subr.bf16.mxu0 0
  %360 = vmatpush2.bf16.msra.mxu0 0
  %361 = vmatprep.mubr.bf16.mxu0 0
  %362 = vmatmul.mubr.bf16.gmra.mxu0 %v127
  %v363 = vpop.f32.mrf.mxu0
  %v364 = vadd.f32 0.0, %v363
  %v365 = vpop.f32.mrf.mxu0
  %v366 = vpop.f32.mrf.mxu0
  %v367 = vpop.f32.mrf.mxu0
  %368 = vdwg.mxu0
  %v369 = vpack.c.bf16 %v323, %v323
  %v370 = vpack.c.bf16 %v325, %v325
  %v371 = vpack.c.bf16 %v364, %v364
  %372 = vmatprep.subr.bf16.mxu0 0
  %373 = vmatpush1.bf16.xpose.msra.mxu0 0
  %374 = vmatprep.subr.bf16.mxu0 0
  %375 = vmatpush1.bf16.xpose.msra.mxu0 0
  %376 = vmatprep.subr.bf16.mxu0 0
  %377 = vmatpush1.bf16.xpose.msra.mxu0 0
  %378 = vmatprep.subr.bf16.mxu0 0
  %379 = vmatpush1.bf16.xpose.msra.mxu0 0
  %380 = vmatprep.subr.bf16.mxu0 0
  %381 = vmatpush1.bf16.xpose.msra.mxu0 0
  %382 = vmatprep.subr.bf16.mxu0 0
  %383 = vmatpush1.bf16.xpose.msra.mxu0 0
  %384 = vmatprep.subr.bf16.mxu0 0
  %385 = vmatpush1.bf16.xpose.msra.mxu0 0
  %386 = vmatprep.subr.bf16.mxu0 0
  %387 = vmatpush1.bf16.xpose.msra.mxu0 %v370
  %388 = vmatprep.subr.bf16.mxu0 0
  %389 = vmatpush2.bf16.xpose.msra.mxu0 0
  %390 = vmatprep.subr.bf16.mxu0 0
  %391 = vmatpush2.bf16.xpose.msra.mxu0 0
  %392 = vmatprep.subr.bf16.mxu0 0
  %393 = vmatpush2.bf16.xpose.msra.mxu0 0
  %394 = vmatprep.subr.bf16.mxu0 0
  %395 = vmatpush2.bf16.xpose.msra.mxu0 0
  %396 = vmatprep.subr.bf16.mxu0 0
  %397 = vmatpush2.bf16.xpose.msra.mxu0 0
  %398 = vmatprep.subr.bf16.mxu0 0
  %399 = vmatpush2.bf16.xpose.msra.mxu0 0
  %400 = vmatprep.subr.bf16.mxu0 0
  %401 = vmatpush2.bf16.xpose.msra.mxu0 0
  %402 = vmatprep.subr.bf16.mxu0 0
  %403 = vmatpush2.bf16.xpose.msra.mxu0 0
  %404 = vmatprep.mubr.bf16.mxu0 0
  %405 = vmatmul.mubr.bf16.gmra.mxu0 %v369
  %v406 = vpop.f32.mrf.mxu0
  %v407 = vadd.f32 0.0, %v406
  %v408 = vpop.f32.mrf.mxu0
  %v409 = vpop.f32.mrf.mxu0
  %v410 = vpop.f32.mrf.mxu0
  %411 = vdwg.mxu0
  %v412 = vmul.f32 %v407, 0.088388346
  %v413 = vlaneseq
  %v414 = vshrl.u32 %v413, 7
  %v415 = vlaneseq
  %v416 = vand.u32 %v415, 127
  %vm417 = vcmp.ge.s32.totalorder %v414, 0
  %vm418 = vcmp.lt.s32.totalorder %v414, 3
  %vm419 = vmand %vm417, %vm418
  %vm420 = vcmp.ge.s32.totalorder %v416, 0
  %vm421 = vmand %vm419, %vm420
  %vm422 = vcmp.lt.s32.totalorder %v416, 3
  %vm423 = vmand %vm421, %vm422
  %vm424 = vcmp.ge.s32.totalorder %v414, 3
  %vm425 = vcmp.lt.s32.totalorder %v414, 6
  %vm426 = vmand %vm424, %vm425
  %vm427 = vcmp.ge.s32.totalorder %v416, 3
  %vm428 = vmand %vm426, %vm427
  %vm429 = vcmp.lt.s32.totalorder %v416, 6
  %vm430 = vmand %vm428, %vm429
  %vm431 = vmor %vm423, %vm430
  %v432 = vsel %vm431, %v412, -1e+30
  %vm433 = vcmask 46080
  %v434 = vsel %vm433, %v432, -inf
  %435 = vmax.xlane.f32.xlu0 %v434
  %v436 = vpop.xlane.xlu0 %435
  %v437 = vsub.f32 %v432, %v436
  %v438 = vmul.f32 %v437, 1.442695
  %v439 = vpow.pop %v438
  %v440 = vsel %vm433, %v439, 0.0
  %441 = vadd.xlane.f32.xlu0 %v440
  %v442 = vpop.xlane.xlu0 %441
  %v443 = vrcp.pop %v442
  %v444 = vmul.f32 %v439, %v443
  %v445 = vpack.c.bf16 %v444, %v444
  %vm446 = vcmask 48128
  %v448 = vsel %vm446, %v445, 0
  %vm450 = vcmask 1042432
  %v452 = vsel %vm450, %v371, 0
  %454 = vmatprep.subr.bf16.mxu0 0
  %455 = vmatpush1.bf16.msra.mxu0 0
  %456 = vmatprep.subr.bf16.mxu0 0
  %457 = vmatpush1.bf16.msra.mxu0 0
  %458 = vmatprep.subr.bf16.mxu0 0
  %459 = vmatpush1.bf16.msra.mxu0 0
  %460 = vmatprep.subr.bf16.mxu0 0
  %461 = vmatpush1.bf16.msra.mxu0 0
  %462 = vmatprep.subr.bf16.mxu0 0
  %463 = vmatpush1.bf16.msra.mxu0 0
  %464 = vmatprep.subr.bf16.mxu0 0
  %465 = vmatpush1.bf16.msra.mxu0 0
  %466 = vmatprep.subr.bf16.mxu0 0
  %467 = vmatpush1.bf16.msra.mxu0 0
  %468 = vmatprep.subr.bf16.mxu0 0
  %469 = vmatpush1.bf16.msra.mxu0 %v452
  %470 = vmatprep.subr.bf16.mxu0 0
  %471 = vmatpush2.bf16.msra.mxu0 0
  %472 = vmatprep.subr.bf16.mxu0 0
  %473 = vmatpush2.bf16.msra.mxu0 0
  %474 = vmatprep.subr.bf16.mxu0 0
  %475 = vmatpush2.bf16.msra.mxu0 0
  %476 = vmatprep.subr.bf16.mxu0 0
  %477 = vmatpush2.bf16.msra.mxu0 0
  %478 = vmatprep.subr.bf16.mxu0 0
  %479 = vmatpush2.bf16.msra.mxu0 0
  %480 = vmatprep.subr.bf16.mxu0 0
  %481 = vmatpush2.bf16.msra.mxu0 0
  %482 = vmatprep.subr.bf16.mxu0 0
  %483 = vmatpush2.bf16.msra.mxu0 0
  %484 = vmatprep.subr.bf16.mxu0 0
  %485 = vmatpush2.bf16.msra.mxu0 0
  %486 = vmatprep.mubr.bf16.mxu0 0
  %487 = vmatmul.mubr.bf16.gmra.mxu0 %v448
  %v488 = vpop.f32.mrf.mxu0
  %v489 = vadd.f32 0.0, %v488
  %v490 = vpop.f32.mrf.mxu0
  %v491 = vpop.f32.mrf.mxu0
  %v492 = vpop.f32.mrf.mxu0
  %493 = vdwg.mxu0
  %v494 = vpack.c.bf16 %v489, %v489
  %v495 = vld [vmem:[%s4] sm:$0xf]
  %v496 = vld [vmem:[%s4 + $0x4] sm:$0xf]
  %v497 = vld [vmem:[%s4 + $0x8] sm:$0xf]
  %v498 = vld [vmem:[%s4 + $0xc] sm:$0xf]
  %v499 = vld [vmem:[%s4 + $0x10] sm:$0xf]
  %v500 = vld [vmem:[%s4 + $0x14] sm:$0xf]
  %v501 = vld [vmem:[%s4 + $0x18] sm:$0xf]
  %v502 = vld [vmem:[%s4 + $0x1c] sm:$0xf]
  %v503 = vld [vmem:[%s4 + $0x20] sm:$0xf]
  %v504 = vld [vmem:[%s4 + $0x24] sm:$0xf]
  %v505 = vld [vmem:[%s4 + $0x28] sm:$0xf]
  %v506 = vld [vmem:[%s4 + $0x2c] sm:$0xf]
  %v507 = vld [vmem:[%s4 + $0x30] sm:$0xf]
  %v508 = vld [vmem:[%s4 + $0x34] sm:$0xf]
  %v509 = vld [vmem:[%s4 + $0x38] sm:$0xf]
  %v510 = vld [vmem:[%s4 + $0x3c] sm:$0xf]
  %v527 = vunpack.c.l.b16 %v495
  %v528 = vunpack.c.l.b16 %v496
  %v529 = vunpack.c.l.b16 %v497
  %v530 = vunpack.c.l.b16 %v498
  %v531 = vunpack.c.l.b16 %v499
  %v532 = vunpack.c.l.b16 %v500
  %v533 = vunpack.c.l.b16 %v501
  %v534 = vunpack.c.l.b16 %v502
  %v535 = vunpack.c.l.b16 %v503
  %v536 = vunpack.c.l.b16 %v504
  %v537 = vunpack.c.l.b16 %v505
  %v538 = vunpack.c.l.b16 %v506
  %v539 = vunpack.c.l.b16 %v507
  %v540 = vunpack.c.l.b16 %v508
  %v541 = vunpack.c.l.b16 %v509
  %v542 = vunpack.c.l.b16 %v510
  %v543 = vpack.c.b16 %v528, %v527
  %v544 = vpack.c.b16 %v530, %v529
  %v545 = vpack.c.b16 %v532, %v531
  %v546 = vpack.c.b16 %v534, %v533
  %v547 = vpack.c.b16 %v536, %v535
  %v548 = vpack.c.b16 %v538, %v537
  %v549 = vpack.c.b16 %v540, %v539
  %v550 = vpack.c.b16 %v542, %v541
  %559 = vmatprep.subr.bf16.mxu0 0
  %560 = vmatpush1.bf16.msra.mxu0 %v550
  %561 = vmatprep.subr.bf16.mxu0 0
  %562 = vmatpush1.bf16.msra.mxu0 %v549
  %563 = vmatprep.subr.bf16.mxu0 0
  %564 = vmatpush1.bf16.msra.mxu0 %v548
  %565 = vmatprep.subr.bf16.mxu0 0
  %566 = vmatpush1.bf16.msra.mxu0 %v547
  %567 = vmatprep.subr.bf16.mxu0 0
  %568 = vmatpush1.bf16.msra.mxu0 %v546
  %569 = vmatprep.subr.bf16.mxu0 0
  %570 = vmatpush1.bf16.msra.mxu0 %v545
  %571 = vmatprep.subr.bf16.mxu0 0
  %572 = vmatpush1.bf16.msra.mxu0 %v544
  %573 = vmatprep.subr.bf16.mxu0 0
  %574 = vmatpush1.bf16.msra.mxu0 %v543
  %575 = vmatprep.subr.bf16.mxu0 0
  %576 = vmatpush2.bf16.msra.mxu0 0
  %577 = vmatprep.subr.bf16.mxu0 0
  %578 = vmatpush2.bf16.msra.mxu0 0
  %579 = vmatprep.subr.bf16.mxu0 0
  %580 = vmatpush2.bf16.msra.mxu0 0
  %581 = vmatprep.subr.bf16.mxu0 0
  %582 = vmatpush2.bf16.msra.mxu0 0
  %583 = vmatprep.subr.bf16.mxu0 0
  %584 = vmatpush2.bf16.msra.mxu0 0
  %585 = vmatprep.subr.bf16.mxu0 0
  %586 = vmatpush2.bf16.msra.mxu0 0
  %587 = vmatprep.subr.bf16.mxu0 0
  %588 = vmatpush2.bf16.msra.mxu0 0
  %589 = vmatprep.subr.bf16.mxu0 0
  %590 = vmatpush2.bf16.msra.mxu0 0
  %591 = vmatprep.mubr.bf16.mxu0 0
  %592 = vmatmul.mubr.bf16.gmra.mxu0 %v494
  %v593 = vpop.f32.mrf.mxu0
  %v594 = vadd.f32 0.0, %v593
  %v595 = vpop.f32.mrf.mxu0
  %v596 = vpop.f32.mrf.mxu0
  %v597 = vpop.f32.mrf.mxu0
  %598 = vdwg.mxu0
  %v599 = vadd.f32 %v124, %v594
  %v600 = vpack.c.bf16 %v599, %v599
  %v601 = vld [vmem:[%s5] sm:$0xff]
  %v602 = vld [vmem:[%s5 + $0x8] sm:$0xff]
  %v603 = vld [vmem:[%s5 + $0x10] sm:$0xff]
  %v604 = vld [vmem:[%s5 + $0x18] sm:$0xff]
  %v605 = vld [vmem:[%s5 + $0x20] sm:$0xff]
  %v606 = vld [vmem:[%s5 + $0x28] sm:$0xff]
  %v607 = vld [vmem:[%s5 + $0x30] sm:$0xff]
  %v608 = vld [vmem:[%s5 + $0x38] sm:$0xff]
  %v609 = vld [vmem:[%s5 + $0x40] sm:$0xff]
  %v610 = vld [vmem:[%s5 + $0x48] sm:$0xff]
  %v611 = vld [vmem:[%s5 + $0x50] sm:$0xff]
  %v612 = vld [vmem:[%s5 + $0x58] sm:$0xff]
  %v613 = vld [vmem:[%s5 + $0x60] sm:$0xff]
  %v614 = vld [vmem:[%s5 + $0x68] sm:$0xff]
  %v615 = vld [vmem:[%s5 + $0x70] sm:$0xff]
  %v616 = vld [vmem:[%s5 + $0x78] sm:$0xff]
  %v617 = vld [vmem:[%s6] sm:$0x3]
  %v619 = vlaneseq
  %v620 = vshrl.u32 %v619, 7
  %v621 = vsub.s32 0, %v620
  %v622 = vrot.slane %v617, %v621
  %v623 = vlaneseq
  %v624 = vshrl.u32 %v623, 7
  %v625 = vsub.s32 1, %v624
  %v626 = vrot.slane %v617, %v625
  %v645 = vunpack.c.l.b16 %v601
  %v646 = vunpack.c.h.b16 %v601
  %v647 = vunpack.c.l.b16 %v602
  %v648 = vunpack.c.h.b16 %v602
  %v649 = vunpack.c.l.b16 %v603
  %v650 = vunpack.c.h.b16 %v603
  %v651 = vunpack.c.l.b16 %v604
  %v652 = vunpack.c.h.b16 %v604
  %v653 = vunpack.c.l.b16 %v605
  %v654 = vunpack.c.h.b16 %v605
  %v655 = vunpack.c.l.b16 %v606
  %v656 = vunpack.c.h.b16 %v606
  %v657 = vunpack.c.l.b16 %v607
  %v658 = vunpack.c.h.b16 %v607
  %v659 = vunpack.c.l.b16 %v608
  %v660 = vunpack.c.h.b16 %v608
  %v661 = vunpack.c.l.b16 %v609
  %v662 = vunpack.c.h.b16 %v609
  %v663 = vunpack.c.l.b16 %v610
  %v664 = vunpack.c.h.b16 %v610
  %v665 = vunpack.c.l.b16 %v611
  %v666 = vunpack.c.h.b16 %v611
  %v667 = vunpack.c.l.b16 %v612
  %v668 = vunpack.c.h.b16 %v612
  %v669 = vunpack.c.l.b16 %v613
  %v670 = vunpack.c.h.b16 %v613
  %v671 = vunpack.c.l.b16 %v614
  %v672 = vunpack.c.h.b16 %v614
  %v673 = vunpack.c.l.b16 %v615
  %v674 = vunpack.c.h.b16 %v615
  %v675 = vunpack.c.l.b16 %v616
  %v676 = vunpack.c.h.b16 %v616
  %v677 = vpack.c.b16 %v647, %v645
  %v678 = vpack.c.b16 %v648, %v646
  %v679 = vpack.c.b16 %v651, %v649
  %v680 = vpack.c.b16 %v652, %v650
  %v681 = vpack.c.b16 %v655, %v653
  %v682 = vpack.c.b16 %v656, %v654
  %v683 = vpack.c.b16 %v659, %v657
  %v684 = vpack.c.b16 %v660, %v658
  %v685 = vpack.c.b16 %v663, %v661
  %v686 = vpack.c.b16 %v664, %v662
  %v687 = vpack.c.b16 %v667, %v665
  %v688 = vpack.c.b16 %v668, %v666
  %v689 = vpack.c.b16 %v671, %v669
  %v690 = vpack.c.b16 %v672, %v670
  %v691 = vpack.c.b16 %v675, %v673
  %v692 = vpack.c.b16 %v676, %v674
  %709 = vmatprep.subr.bf16.mxu0 %v692
  %710 = vmatpush1.bf16.msra.mxu0 %v691
  %711 = vmatprep.subr.bf16.mxu0 %v690
  %712 = vmatpush1.bf16.msra.mxu0 %v689
  %713 = vmatprep.subr.bf16.mxu0 %v688
  %714 = vmatpush1.bf16.msra.mxu0 %v687
  %715 = vmatprep.subr.bf16.mxu0 %v686
  %716 = vmatpush1.bf16.msra.mxu0 %v685
  %717 = vmatprep.subr.bf16.mxu0 %v684
  %718 = vmatpush1.bf16.msra.mxu0 %v683
  %719 = vmatprep.subr.bf16.mxu0 %v682
  %720 = vmatpush1.bf16.msra.mxu0 %v681
  %721 = vmatprep.subr.bf16.mxu0 %v680
  %722 = vmatpush1.bf16.msra.mxu0 %v679
  %723 = vmatprep.subr.bf16.mxu0 %v678
  %724 = vmatpush1.bf16.msra.mxu0 %v677
  %725 = vmatprep.subr.bf16.mxu0 0
  %726 = vmatpush2.bf16.msra.mxu0 0
  %727 = vmatprep.subr.bf16.mxu0 0
  %728 = vmatpush2.bf16.msra.mxu0 0
  %729 = vmatprep.subr.bf16.mxu0 0
  %730 = vmatpush2.bf16.msra.mxu0 0
  %731 = vmatprep.subr.bf16.mxu0 0
  %732 = vmatpush2.bf16.msra.mxu0 0
  %733 = vmatprep.subr.bf16.mxu0 0
  %734 = vmatpush2.bf16.msra.mxu0 0
  %735 = vmatprep.subr.bf16.mxu0 0
  %736 = vmatpush2.bf16.msra.mxu0 0
  %737 = vmatprep.subr.bf16.mxu0 0
  %738 = vmatpush2.bf16.msra.mxu0 0
  %739 = vmatprep.subr.bf16.mxu0 0
  %740 = vmatpush2.bf16.msra.mxu0 0
  %741 = vmatprep.mubr.bf16.mxu0 0
  %742 = vmatmul.mubr.bf16.gmra.mxu0 %v600
  %v743 = vpop.f32.mrf.mxu0
  %v744 = vadd.f32 %v622, %v743
  %v745 = vpop.f32.mrf.mxu0
  %v746 = vadd.f32 %v626, %v745
  %v747 = vpop.f32.mrf.mxu0
  %v748 = vpop.f32.mrf.mxu0
  %749 = vdwg.mxu0
  %v750 = vmax.f32 %v744, 0.0
  %v751 = vmax.f32 %v746, 0.0
  %v752 = vpack.c.bf16 %v750, %v750
  %v753 = vpack.c.bf16 %v751, %v751
  %v754 = vld [vmem:[%s7] sm:$0xf]
  %v755 = vld [vmem:[%s7 + $0x4] sm:$0xf]
  %v756 = vld [vmem:[%s7 + $0x8] sm:$0xf]
  %v757 = vld [vmem:[%s7 + $0xc] sm:$0xf]
  %v758 = vld [vmem:[%s7 + $0x10] sm:$0xf]
  %v759 = vld [vmem:[%s7 + $0x14] sm:$0xf]
  %v760 = vld [vmem:[%s7 + $0x18] sm:$0xf]
  %v761 = vld [vmem:[%s7 + $0x1c] sm:$0xf]
  %v762 = vld [vmem:[%s7 + $0x20] sm:$0xf]
  %v763 = vld [vmem:[%s7 + $0x24] sm:$0xf]
  %v764 = vld [vmem:[%s7 + $0x28] sm:$0xf]
  %v765 = vld [vmem:[%s7 + $0x2c] sm:$0xf]
  %v766 = vld [vmem:[%s7 + $0x30] sm:$0xf]
  %v767 = vld [vmem:[%s7 + $0x34] sm:$0xf]
  %v768 = vld [vmem:[%s7 + $0x38] sm:$0xf]
  %v769 = vld [vmem:[%s7 + $0x3c] sm:$0xf]
  %v770 = vld [vmem:[%s7 + $0x40] sm:$0xf]
  %v771 = vld [vmem:[%s7 + $0x44] sm:$0xf]
  %v772 = vld [vmem:[%s7 + $0x48] sm:$0xf]
  %v773 = vld [vmem:[%s7 + $0x4c] sm:$0xf]
  %v774 = vld [vmem:[%s7 + $0x50] sm:$0xf]
  %v775 = vld [vmem:[%s7 + $0x54] sm:$0xf]
  %v776 = vld [vmem:[%s7 + $0x58] sm:$0xf]
  %v777 = vld [vmem:[%s7 + $0x5c] sm:$0xf]
  %v778 = vld [vmem:[%s7 + $0x60] sm:$0xf]
  %v779 = vld [vmem:[%s7 + $0x64] sm:$0xf]
  %v780 = vld [vmem:[%s7 + $0x68] sm:$0xf]
  %v781 = vld [vmem:[%s7 + $0x6c] sm:$0xf]
  %v782 = vld [vmem:[%s7 + $0x70] sm:$0xf]
  %v783 = vld [vmem:[%s7 + $0x74] sm:$0xf]
  %v784 = vld [vmem:[%s7 + $0x78] sm:$0xf]
  %v785 = vld [vmem:[%s7 + $0x7c] sm:$0xf]
  %v818 = vunpack.c.l.b16 %v754
  %v819 = vunpack.c.l.b16 %v755
  %v820 = vunpack.c.l.b16 %v756
  %v821 = vunpack.c.l.b16 %v757
  %v822 = vunpack.c.l.b16 %v758
  %v823 = vunpack.c.l.b16 %v759
  %v824 = vunpack.c.l.b16 %v760
  %v825 = vunpack.c.l.b16 %v761
  %v826 = vunpack.c.l.b16 %v762
  %v827 = vunpack.c.l.b16 %v763
  %v828 = vunpack.c.l.b16 %v764
  %v829 = vunpack.c.l.b16 %v765
  %v830 = vunpack.c.l.b16 %v766
  %v831 = vunpack.c.l.b16 %v767
  %v832 = vunpack.c.l.b16 %v768
  %v833 = vunpack.c.l.b16 %v769
  %v834 = vunpack.c.l.b16 %v770
  %v835 = vunpack.c.l.b16 %v771
  %v836 = vunpack.c.l.b16 %v772
  %v837 = vunpack.c.l.b16 %v773
  %v838 = vunpack.c.l.b16 %v774
  %v839 = vunpack.c.l.b16 %v775
  %v840 = vunpack.c.l.b16 %v776
  %v841 = vunpack.c.l.b16 %v777
  %v842 = vunpack.c.l.b16 %v778
  %v843 = vunpack.c.l.b16 %v779
  %v844 = vunpack.c.l.b16 %v780
  %v845 = vunpack.c.l.b16 %v781
  %v846 = vunpack.c.l.b16 %v782
  %v847 = vunpack.c.l.b16 %v783
  %v848 = vunpack.c.l.b16 %v784
  %v849 = vunpack.c.l.b16 %v785
  %v850 = vpack.c.b16 %v819, %v818
  %v851 = vpack.c.b16 %v821, %v820
  %v852 = vpack.c.b16 %v823, %v822
  %v853 = vpack.c.b16 %v825, %v824
  %v854 = vpack.c.b16 %v827, %v826
  %v855 = vpack.c.b16 %v829, %v828
  %v856 = vpack.c.b16 %v831, %v830
  %v857 = vpack.c.b16 %v833, %v832
  %v858 = vpack.c.b16 %v835, %v834
  %v859 = vpack.c.b16 %v837, %v836
  %v860 = vpack.c.b16 %v839, %v838
  %v861 = vpack.c.b16 %v841, %v840
  %v862 = vpack.c.b16 %v843, %v842
  %v863 = vpack.c.b16 %v845, %v844
  %v864 = vpack.c.b16 %v847, %v846
  %v865 = vpack.c.b16 %v849, %v848
  %882 = vmatprep.subr.bf16.mxu0 0
  %883 = vmatpush1.bf16.msra.mxu0 %v857
  %884 = vmatprep.subr.bf16.mxu0 0
  %885 = vmatpush1.bf16.msra.mxu0 %v856
  %886 = vmatprep.subr.bf16.mxu0 0
  %887 = vmatpush1.bf16.msra.mxu0 %v855
  %888 = vmatprep.subr.bf16.mxu0 0
  %889 = vmatpush1.bf16.msra.mxu0 %v854
  %890 = vmatprep.subr.bf16.mxu0 0
  %891 = vmatpush1.bf16.msra.mxu0 %v853
  %892 = vmatprep.subr.bf16.mxu0 0
  %893 = vmatpush1.bf16.msra.mxu0 %v852
  %894 = vmatprep.subr.bf16.mxu0 0
  %895 = vmatpush1.bf16.msra.mxu0 %v851
  %896 = vmatprep.subr.bf16.mxu0 0
  %897 = vmatpush1.bf16.msra.mxu0 %v850
  %898 = vmatprep.subr.bf16.mxu0 0
  %899 = vmatpush2.bf16.msra.mxu0 %v865
  %900 = vmatprep.subr.bf16.mxu0 0
  %901 = vmatpush2.bf16.msra.mxu0 %v864
  %902 = vmatprep.subr.bf16.mxu0 0
  %903 = vmatpush2.bf16.msra.mxu0 %v863
  %904 = vmatprep.subr.bf16.mxu0 0
  %905 = vmatpush2.bf16.msra.mxu0 %v862
  %906 = vmatprep.subr.bf16.mxu0 0
  %907 = vmatpush2.bf16.msra.mxu0 %v861
  %908 = vmatprep.subr.bf16.mxu0 0
  %909 = vmatpush2.bf16.msra.mxu0 %v860
  %910 = vmatprep.subr.bf16.mxu0 0
  %911 = vmatpush2.bf16.msra.mxu0 %v859
  %912 = vmatprep.subr.bf16.mxu0 0
  %913 = vmatpush2.bf16.msra.mxu0 %v858
  %914 = vmatprep.mubr.bf16.mxu0 %v753
  %915 = vmatmul.mubr.bf16.gmra.mxu0 %v752
  %v916 = vpop.f32.mrf.mxu0
  %v917 = vadd.f32 0.0, %v916
  %v918 = vpop.f32.mrf.mxu0
  %v919 = vpop.f32.mrf.mxu0
  %v920 = vpop.f32.mrf.mxu0
  %921 = vdwg.mxu0
  %v922 = vadd.f32 %v599, %v917
  %v923 = vld [vmem:[%s8] sm:$0x1]
  %v925 = vlaneseq
  %v926 = vshrl.u32 %v925, 7
  %v927 = vsub.s32 0, %v926
  %v928 = vrot.slane %v923, %v927
  %v930 = vadd.f32 %v922, %v928
  %v931 = vpack.c.bf16 %v930, %v930
  %v932 = vld [vmem:[%s9] sm:$0xff]
  %v933 = vld [vmem:[%s9 + $0x8] sm:$0xff]
  %v934 = vld [vmem:[%s9 + $0x10] sm:$0xff]
  %v935 = vld [vmem:[%s9 + $0x18] sm:$0xff]
  %v936 = vld [vmem:[%s9 + $0x20] sm:$0xff]
  %v937 = vld [vmem:[%s9 + $0x28] sm:$0xff]
  %v938 = vld [vmem:[%s9 + $0x30] sm:$0xff]
  %v939 = vld [vmem:[%s9 + $0x38] sm:$0xff]
  %v940 = vld [vmem:[%s9 + $0x40] sm:$0xff]
  %v941 = vld [vmem:[%s9 + $0x48] sm:$0xff]
  %v942 = vld [vmem:[%s9 + $0x50] sm:$0xff]
  %v943 = vld [vmem:[%s9 + $0x58] sm:$0xff]
  %v944 = vld [vmem:[%s9 + $0x60] sm:$0xff]
  %v945 = vld [vmem:[%s9 + $0x68] sm:$0xff]
  %v946 = vld [vmem:[%s9 + $0x70] sm:$0xff]
  %v947 = vld [vmem:[%s9 + $0x78] sm:$0xff]
  %v948 = vld [vmem:[%s9 + $0x80] sm:$0xff]
  %v949 = vld [vmem:[%s9 + $0x88] sm:$0xff]
  %v950 = vld [vmem:[%s9 + $0x90] sm:$0xff]
  %v951 = vld [vmem:[%s9 + $0x98] sm:$0xff]
  %v952 = vld [vmem:[%s9 + $0xa0] sm:$0xff]
  %v953 = vld [vmem:[%s9 + $0xa8] sm:$0xff]
  %v954 = vld [vmem:[%s9 + $0xb0] sm:$0xff]
  %v955 = vld [vmem:[%s9 + $0xb8] sm:$0xff]
  %v956 = vld [vmem:[%s9 + $0xc0] sm:$0xff]
  %v957 = vld [vmem:[%s9 + $0xc8] sm:$0xff]
  %v958 = vld [vmem:[%s9 + $0xd0] sm:$0xff]
  %v959 = vld [vmem:[%s9 + $0xd8] sm:$0xff]
  %v960 = vld [vmem:[%s9 + $0xe0] sm:$0xff]
  %v961 = vld [vmem:[%s9 + $0xe8] sm:$0xff]
  %v962 = vld [vmem:[%s9 + $0xf0] sm:$0xff]
  %v963 = vld [vmem:[%s9 + $0xf8] sm:$0xff]
  %v964 = vld [vmem:[%s9 + $0x100] sm:$0xff]
  %v965 = vld [vmem:[%s9 + $0x108] sm:$0xff]
  %v966 = vld [vmem:[%s9 + $0x110] sm:$0xff]
  %v967 = vld [vmem:[%s9 + $0x118] sm:$0xff]
  %v968 = vld [vmem:[%s9 + $0x120] sm:$0xff]
  %v969 = vld [vmem:[%s9 + $0x128] sm:$0xff]
  %v970 = vld [vmem:[%s9 + $0x130] sm:$0xff]
  %v971 = vld [vmem:[%s9 + $0x138] sm:$0xff]
  %v972 = vld [vmem:[%s9 + $0x140] sm:$0xff]
  %v973 = vld [vmem:[%s9 + $0x148] sm:$0xff]
  %v974 = vld [vmem:[%s9 + $0x150] sm:$0xff]
  %v975 = vld [vmem:[%s9 + $0x158] sm:$0xff]
  %v976 = vld [vmem:[%s9 + $0x160] sm:$0xff]
  %v977 = vld [vmem:[%s9 + $0x168] sm:$0xff]
  %v978 = vld [vmem:[%s9 + $0x170] sm:$0xff]
  %v979 = vld [vmem:[%s9 + $0x178] sm:$0xff]
  %v980 = vld [vmem:[%s10] sm:$0x3f]
  %v982 = vlaneseq
  %v983 = vshrl.u32 %v982, 7
  %v984 = vsub.s32 0, %v983
  %v985 = vrot.slane %v980, %v984
  %v986 = vlaneseq
  %v987 = vshrl.u32 %v986, 7
  %v988 = vsub.s32 1, %v987
  %v989 = vrot.slane %v980, %v988
  %v990 = vlaneseq
  %v991 = vshrl.u32 %v990, 7
  %v992 = vsub.s32 2, %v991
  %v993 = vrot.slane %v980, %v992
  %v994 = vlaneseq
  %v995 = vshrl.u32 %v994, 7
  %v996 = vsub.s32 3, %v995
  %v997 = vrot.slane %v980, %v996
  %v998 = vlaneseq
  %v999 = vshrl.u32 %v998, 7
  %v1000 = vsub.s32 4, %v999
  %v1001 = vrot.slane %v980, %v1000
  %v1002 = vlaneseq
  %v1003 = vshrl.u32 %v1002, 7
  %v1004 = vsub.s32 5, %v1003
  %v1005 = vrot.slane %v980, %v1004
  %v1060 = vunpack.c.l.b16 %v932
  %v1061 = vunpack.c.h.b16 %v932
  %v1062 = vunpack.c.l.b16 %v933
  %v1063 = vunpack.c.h.b16 %v933
  %v1064 = vunpack.c.l.b16 %v934
  %v1065 = vunpack.c.h.b16 %v934
  %v1066 = vunpack.c.l.b16 %v935
  %v1067 = vunpack.c.h.b16 %v935
  %v1068 = vunpack.c.l.b16 %v936
  %v1069 = vunpack.c.h.b16 %v936
  %v1070 = vunpack.c.l.b16 %v937
  %v1071 = vunpack.c.h.b16 %v937
  %v1072 = vunpack.c.l.b16 %v938
  %v1073 = vunpack.c.h.b16 %v938
  %v1074 = vunpack.c.l.b16 %v939
  %v1075 = vunpack.c.h.b16 %v939
  %v1076 = vunpack.c.l.b16 %v940
  %v1077 = vunpack.c.h.b16 %v940
  %v1078 = vunpack.c.l.b16 %v941
  %v1079 = vunpack.c.h.b16 %v941
  %v1080 = vunpack.c.l.b16 %v942
  %v1081 = vunpack.c.h.b16 %v942
  %v1082 = vunpack.c.l.b16 %v943
  %v1083 = vunpack.c.h.b16 %v943
  %v1084 = vunpack.c.l.b16 %v944
  %v1085 = vunpack.c.h.b16 %v944
  %v1086 = vunpack.c.l.b16 %v945
  %v1087 = vunpack.c.h.b16 %v945
  %v1088 = vunpack.c.l.b16 %v946
  %v1089 = vunpack.c.h.b16 %v946
  %v1090 = vunpack.c.l.b16 %v947
  %v1091 = vunpack.c.h.b16 %v947
  %v1092 = vunpack.c.l.b16 %v948
  %v1093 = vunpack.c.h.b16 %v948
  %v1094 = vunpack.c.l.b16 %v949
  %v1095 = vunpack.c.h.b16 %v949
  %v1096 = vunpack.c.l.b16 %v950
  %v1097 = vunpack.c.h.b16 %v950
  %v1098 = vunpack.c.l.b16 %v951
  %v1099 = vunpack.c.h.b16 %v951
  %v1100 = vunpack.c.l.b16 %v952
  %v1101 = vunpack.c.h.b16 %v952
  %v1102 = vunpack.c.l.b16 %v953
  %v1103 = vunpack.c.h.b16 %v953
  %v1104 = vunpack.c.l.b16 %v954
  %v1105 = vunpack.c.h.b16 %v954
  %v1106 = vunpack.c.l.b16 %v955
  %v1107 = vunpack.c.h.b16 %v955
  %v1108 = vunpack.c.l.b16 %v956
  %v1109 = vunpack.c.h.b16 %v956
  %v1110 = vunpack.c.l.b16 %v957
  %v1111 = vunpack.c.h.b16 %v957
  %v1112 = vunpack.c.l.b16 %v958
  %v1113 = vunpack.c.h.b16 %v958
  %v1114 = vunpack.c.l.b16 %v959
  %v1115 = vunpack.c.h.b16 %v959
  %v1116 = vunpack.c.l.b16 %v960
  %v1117 = vunpack.c.h.b16 %v960
  %v1118 = vunpack.c.l.b16 %v961
  %v1119 = vunpack.c.h.b16 %v961
  %v1120 = vunpack.c.l.b16 %v962
  %v1121 = vunpack.c.h.b16 %v962
  %v1122 = vunpack.c.l.b16 %v963
  %v1123 = vunpack.c.h.b16 %v963
  %v1124 = vunpack.c.l.b16 %v964
  %v1125 = vunpack.c.h.b16 %v964
  %v1126 = vunpack.c.l.b16 %v965
  %v1127 = vunpack.c.h.b16 %v965
  %v1128 = vunpack.c.l.b16 %v966
  %v1129 = vunpack.c.h.b16 %v966
  %v1130 = vunpack.c.l.b16 %v967
  %v1131 = vunpack.c.h.b16 %v967
  %v1132 = vunpack.c.l.b16 %v968
  %v1133 = vunpack.c.h.b16 %v968
  %v1134 = vunpack.c.l.b16 %v969
  %v1135 = vunpack.c.h.b16 %v969
  %v1136 = vunpack.c.l.b16 %v970
  %v1137 = vunpack.c.h.b16 %v970
  %v1138 = vunpack.c.l.b16 %v971
  %v1139 = vunpack.c.h.b16 %v971
  %v1140 = vunpack.c.l.b16 %v972
  %v1141 = vunpack.c.h.b16 %v972
  %v1142 = vunpack.c.l.b16 %v973
  %v1143 = vunpack.c.h.b16 %v973
  %v1144 = vunpack.c.l.b16 %v974
  %v1145 = vunpack.c.h.b16 %v974
  %v1146 = vunpack.c.l.b16 %v975
  %v1147 = vunpack.c.h.b16 %v975
  %v1148 = vunpack.c.l.b16 %v976
  %v1149 = vunpack.c.h.b16 %v976
  %v1150 = vunpack.c.l.b16 %v977
  %v1151 = vunpack.c.h.b16 %v977
  %v1152 = vunpack.c.l.b16 %v978
  %v1153 = vunpack.c.h.b16 %v978
  %v1154 = vunpack.c.l.b16 %v979
  %v1155 = vunpack.c.h.b16 %v979
  %v1156 = vpack.c.b16 %v1066, %v1060
  %v1157 = vpack.c.b16 %v1067, %v1061
  %v1158 = vpack.c.b16 %v1068, %v1062
  %v1159 = vpack.c.b16 %v1069, %v1063
  %v1160 = vpack.c.b16 %v1070, %v1064
  %v1161 = vpack.c.b16 %v1071, %v1065
  %v1162 = vpack.c.b16 %v1078, %v1072
  %v1163 = vpack.c.b16 %v1079, %v1073
  %v1164 = vpack.c.b16 %v1080, %v1074
  %v1165 = vpack.c.b16 %v1081, %v1075
  %v1166 = vpack.c.b16 %v1082, %v1076
  %v1167 = vpack.c.b16 %v1083, %v1077
  %v1168 = vpack.c.b16 %v1090, %v1084
  %v1169 = vpack.c.b16 %v1091, %v1085
  %v1170 = vpack.c.b16 %v1092, %v1086
  %v1171 = vpack.c.b16 %v1093, %v1087
  %v1172 = vpack.c.b16 %v1094, %v1088
  %v1173 = vpack.c.b16 %v1095, %v1089
  %v1174 = vpack.c.b16 %v1102, %v1096
  %v1175 = vpack.c.b16 %v1103, %v1097
  %v1176 = vpack.c.b16 %v1104, %v1098
  %v1177 = vpack.c.b16 %v1105, %v1099
  %v1178 = vpack.c.b16 %v1106, %v1100
  %v1179 = vpack.c.b16 %v1107, %v1101
  %v1180 = vpack.c.b16 %v1114, %v1108
  %v1181 = vpack.c.b16 %v1115, %v1109
  %v1182 = vpack.c.b16 %v1116, %v1110
  %v1183 = vpack.c.b16 %v1117, %v1111
  %v1184 = vpack.c.b16 %v1118, %v1112
  %v1185 = vpack.c.b16 %v1119, %v1113
  %v1186 = vpack.c.b16 %v1126, %v1120
  %v1187 = vpack.c.b16 %v1127, %v1121
  %v1188 = vpack.c.b16 %v1128, %v1122
  %v1189 = vpack.c.b16 %v1129, %v1123
  %v1190 = vpack.c.b16 %v1130, %v1124
  %v1191 = vpack.c.b16 %v1131, %v1125
  %v1192 = vpack.c.b16 %v1138, %v1132
  %v1193 = vpack.c.b16 %v1139, %v1133
  %v1194 = vpack.c.b16 %v1140, %v1134
  %v1195 = vpack.c.b16 %v1141, %v1135
  %v1196 = vpack.c.b16 %v1142, %v1136
  %v1197 = vpack.c.b16 %v1143, %v1137
  %v1198 = vpack.c.b16 %v1150, %v1144
  %v1199 = vpack.c.b16 %v1151, %v1145
  %v1200 = vpack.c.b16 %v1152, %v1146
  %v1201 = vpack.c.b16 %v1153, %v1147
  %v1202 = vpack.c.b16 %v1154, %v1148
  %v1203 = vpack.c.b16 %v1155, %v1149
  %1252 = vmatprep.subr.bf16.mxu0 %v1199
  %1253 = vmatpush1.bf16.msra.mxu0 %v1198
  %1254 = vmatprep.subr.bf16.mxu0 %v1193
  %1255 = vmatpush1.bf16.msra.mxu0 %v1192
  %1256 = vmatprep.subr.bf16.mxu0 %v1187
  %1257 = vmatpush1.bf16.msra.mxu0 %v1186
  %1258 = vmatprep.subr.bf16.mxu0 %v1181
  %1259 = vmatpush1.bf16.msra.mxu0 %v1180
  %1260 = vmatprep.subr.bf16.mxu0 %v1175
  %1261 = vmatpush1.bf16.msra.mxu0 %v1174
  %1262 = vmatprep.subr.bf16.mxu0 %v1169
  %1263 = vmatpush1.bf16.msra.mxu0 %v1168
  %1264 = vmatprep.subr.bf16.mxu0 %v1163
  %1265 = vmatpush1.bf16.msra.mxu0 %v1162
  %1266 = vmatprep.subr.bf16.mxu0 %v1157
  %1267 = vmatpush1.bf16.msra.mxu0 %v1156
  %1268 = vmatprep.subr.bf16.mxu0 0
  %1269 = vmatpush2.bf16.msra.mxu0 0
  %1270 = vmatprep.subr.bf16.mxu0 0
  %1271 = vmatpush2.bf16.msra.mxu0 0
  %1272 = vmatprep.subr.bf16.mxu0 0
  %1273 = vmatpush2.bf16.msra.mxu0 0
  %1274 = vmatprep.subr.bf16.mxu0 0
  %1275 = vmatpush2.bf16.msra.mxu0 0
  %1276 = vmatprep.subr.bf16.mxu0 0
  %1277 = vmatpush2.bf16.msra.mxu0 0
  %1278 = vmatprep.subr.bf16.mxu0 0
  %1279 = vmatpush2.bf16.msra.mxu0 0
  %1280 = vmatprep.subr.bf16.mxu0 0
  %1281 = vmatpush2.bf16.msra.mxu0 0
  %1282 = vmatprep.subr.bf16.mxu0 0
  %1283 = vmatpush2.bf16.msra.mxu0 0
  %1284 = vmatprep.mubr.bf16.mxu0 0
  %1285 = vmatmul.mubr.bf16.gmra.mxu0 %v931
  %v1286 = vpop.f32.mrf.mxu0
  %v1287 = vadd.f32 %v985, %v1286
  %v1288 = vpop.f32.mrf.mxu0
  %v1289 = vadd.f32 %v989, %v1288
  %v1290 = vpop.f32.mrf.mxu0
  %v1291 = vpop.f32.mrf.mxu0
  %1292 = vdwg.mxu0
  %1293 = vmatprep.subr.bf16.mxu0 %v1201
  %1294 = vmatpush1.bf16.msra.mxu0 %v1200
  %1295 = vmatprep.subr.bf16.mxu0 %v1195
  %1296 = vmatpush1.bf16.msra.mxu0 %v1194
  %1297 = vmatprep.subr.bf16.mxu0 %v1189
  %1298 = vmatpush1.bf16.msra.mxu0 %v1188
  %1299 = vmatprep.subr.bf16.mxu0 %v1183
  %1300 = vmatpush1.bf16.msra.mxu0 %v1182
  %1301 = vmatprep.subr.bf16.mxu0 %v1177
  %1302 = vmatpush1.bf16.msra.mxu0 %v1176
  %1303 = vmatprep.subr.bf16.mxu0 %v1171
  %1304 = vmatpush1.bf16.msra.mxu0 %v1170
  %1305 = vmatprep.subr.bf16.mxu0 %v1165
  %1306 = vmatpush1.bf16.msra.mxu0 %v1164
  %1307 = vmatprep.subr.bf16.mxu0 %v1159
  %1308 = vmatpush1.bf16.msra.mxu0 %v1158
  %1309 = vmatprep.subr.bf16.mxu0 0
  %1310 = vmatpush2.bf16.msra.mxu0 0
  %1311 = vmatprep.subr.bf16.mxu0 0
  %1312 = vmatpush2.bf16.msra.mxu0 0
  %1313 = vmatprep.subr.bf16.mxu0 0
  %1314 = vmatpush2.bf16.msra.mxu0 0
  %1315 = vmatprep.subr.bf16.mxu0 0
  %1316 = vmatpush2.bf16.msra.mxu0 0
  %1317 = vmatprep.subr.bf16.mxu0 0
  %1318 = vmatpush2.bf16.msra.mxu0 0
  %1319 = vmatprep.subr.bf16.mxu0 0
  %1320 = vmatpush2.bf16.msra.mxu0 0
  %1321 = vmatprep.subr.bf16.mxu0 0
  %1322 = vmatpush2.bf16.msra.mxu0 0
  %1323 = vmatprep.subr.bf16.mxu0 0
  %1324 = vmatpush2.bf16.msra.mxu0 0
  %1325 = vmatprep.mubr.bf16.mxu0 0
  %1326 = vmatmul.mubr.bf16.gmra.mxu0 %v931
  %v1327 = vpop.f32.mrf.mxu0
  %v1328 = vadd.f32 %v993, %v1327
  %v1329 = vpop.f32.mrf.mxu0
  %v1330 = vadd.f32 %v997, %v1329
  %v1331 = vpop.f32.mrf.mxu0
  %v1332 = vpop.f32.mrf.mxu0
  %1333 = vdwg.mxu0
  %1334 = vmatprep.subr.bf16.mxu0 %v1203
  %1335 = vmatpush1.bf16.msra.mxu0 %v1202
  %1336 = vmatprep.subr.bf16.mxu0 %v1197
  %1337 = vmatpush1.bf16.msra.mxu0 %v1196
  %1338 = vmatprep.subr.bf16.mxu0 %v1191
  %1339 = vmatpush1.bf16.msra.mxu0 %v1190
  %1340 = vmatprep.subr.bf16.mxu0 %v1185
  %1341 = vmatpush1.bf16.msra.mxu0 %v1184
  %1342 = vmatprep.subr.bf16.mxu0 %v1179
  %1343 = vmatpush1.bf16.msra.mxu0 %v1178
  %1344 = vmatprep.subr.bf16.mxu0 %v1173
  %1345 = vmatpush1.bf16.msra.mxu0 %v1172
  %1346 = vmatprep.subr.bf16.mxu0 %v1167
  %1347 = vmatpush1.bf16.msra.mxu0 %v1166
  %1348 = vmatprep.subr.bf16.mxu0 %v1161
  %1349 = vmatpush1.bf16.msra.mxu0 %v1160
  %1350 = vmatprep.subr.bf16.mxu0 0
  %1351 = vmatpush2.bf16.msra.mxu0 0
  %1352 = vmatprep.subr.bf16.mxu0 0
  %1353 = vmatpush2.bf16.msra.mxu0 0
  %1354 = vmatprep.subr.bf16.mxu0 0
  %1355 = vmatpush2.bf16.msra.mxu0 0
  %1356 = vmatprep.subr.bf16.mxu0 0
  %1357 = vmatpush2.bf16.msra.mxu0 0
  %1358 = vmatprep.subr.bf16.mxu0 0
  %1359 = vmatpush2.bf16.msra.mxu0 0
  %1360 = vmatprep.subr.bf16.mxu0 0
  %1361 = vmatpush2.bf16.msra.mxu0 0
  %1362 = vmatprep.subr.bf16.mxu0 0
  %1363 = vmatpush2.bf16.msra.mxu0 0
  %1364 = vmatprep.subr.bf16.mxu0 0
  %1365 = vmatpush2.bf16.msra.mxu0 0
  %1366 = vmatprep.mubr.bf16.mxu0 0
  %1367 = vmatmul.mubr.bf16.gmra.mxu0 %v931
  %v1368 = vpop.f32.mrf.mxu0
  %v1369 = vadd.f32 %v1001, %v1368
  %v1370 = vpop.f32.mrf.mxu0
  %v1371 = vadd.f32 %v1005, %v1370
  %v1372 = vpop.f32.mrf.mxu0
  %v1373 = vpop.f32.mrf.mxu0
  %1374 = vdwg.mxu0
  %v1375 = vmax.f32 %v1287, 0.0
  %v1376 = vmax.f32 %v1289, 0.0
  %v1377 = vmax.f32 %v1328, 0.0
  %v1378 = vmax.f32 %v1330, 0.0
  %v1379 = vmax.f32 %v1369, 0.0
  %v1380 = vmax.f32 %v1371, 0.0
  %v1381 = vpack.c.bf16 %v1375, %v1375
  %v1382 = vpack.c.bf16 %v1376, %v1376
  %v1383 = vpack.c.bf16 %v1377, %v1377
  %v1384 = vpack.c.bf16 %v1378, %v1378
  %v1385 = vpack.c.bf16 %v1379, %v1379
  %v1386 = vpack.c.bf16 %v1380, %v1380
  %v1387 = vld [vmem:[%s11] sm:$0xff]
  %v1388 = vld [vmem:[%s11 + $0x8] sm:$0xf]
  %v1389 = vld [vmem:[%s11 + $0xc] sm:$0xff]
  %v1390 = vld [vmem:[%s11 + $0x14] sm:$0xf]
  %v1391 = vld [vmem:[%s11 + $0x18] sm:$0xff]
  %v1392 = vld [vmem:[%s11 + $0x20] sm:$0xf]
  %v1393 = vld [vmem:[%s11 + $0x24] sm:$0xff]
  %v1394 = vld [vmem:[%s11 + $0x2c] sm:$0xf]
  %v1395 = vld [vmem:[%s11 + $0x30] sm:$0xff]
  %v1396 = vld [vmem:[%s11 + $0x38] sm:$0xf]
  %v1397 = vld [vmem:[%s11 + $0x3c] sm:$0xff]
  %v1398 = vld [vmem:[%s11 + $0x44] sm:$0xf]
  %v1399 = vld [vmem:[%s11 + $0x48] sm:$0xff]
  %v1400 = vld [vmem:[%s11 + $0x50] sm:$0xf]
  %v1401 = vld [vmem:[%s11 + $0x54] sm:$0xff]
  %v1402 = vld [vmem:[%s11 + $0x5c] sm:$0xf]
  %v1403 = vld [vmem:[%s11 + $0x60] sm:$0xff]
  %v1404 = vld [vmem:[%s11 + $0x68] sm:$0xf]
  %v1405 = vld [vmem:[%s11 + $0x6c] sm:$0xff]
  %v1406 = vld [vmem:[%s11 + $0x74] sm:$0xf]
  %v1407 = vld [vmem:[%s11 + $0x78] sm:$0xff]
  %v1408 = vld [vmem:[%s11 + $0x80] sm:$0xf]
  %v1409 = vld [vmem:[%s11 + $0x84] sm:$0xff]
  %v1410 = vld [vmem:[%s11 + $0x8c] sm:$0xf]
  %v1411 = vld [vmem:[%s11 + $0x90] sm:$0xff]
  %v1412 = vld [vmem:[%s11 + $0x98] sm:$0xf]
  %v1413 = vld [vmem:[%s11 + $0x9c] sm:$0xff]
  %v1414 = vld [vmem:[%s11 + $0xa4] sm:$0xf]
  %v1415 = vld [vmem:[%s11 + $0xa8] sm:$0xff]
  %v1416 = vld [vmem:[%s11 + $0xb0] sm:$0xf]
  %v1417 = vld [vmem:[%s11 + $0xb4] sm:$0xff]
  %v1418 = vld [vmem:[%s11 + $0xbc] sm:$0xf]
  %v1419 = vld [vmem:[%s11 + $0xc0] sm:$0xff]
  %v1420 = vld [vmem:[%s11 + $0xc8] sm:$0xf]
  %v1421 = vld [vmem:[%s11 + $0xcc] sm:$0xff]
  %v1422 = vld [vmem:[%s11 + $0xd4] sm:$0xf]
  %v1423 = vld [vmem:[%s11 + $0xd8] sm:$0xff]
  %v1424 = vld [vmem:[%s11 + $0xe0] sm:$0xf]
  %v1425 = vld [vmem:[%s11 + $0xe4] sm:$0xff]
  %v1426 = vld [vmem:[%s11 + $0xec] sm:$0xf]
  %v1427 = vld [vmem:[%s11 + $0xf0] sm:$0xff]
  %v1428 = vld [vmem:[%s11 + $0xf8] sm:$0xf]
  %v1429 = vld [vmem:[%s11 + $0xfc] sm:$0xff]
  %v1430 = vld [vmem:[%s11 + $0x104] sm:$0xf]
  %v1431 = vld [vmem:[%s11 + $0x108] sm:$0xff]
  %v1432 = vld [vmem:[%s11 + $0x110] sm:$0xf]
  %v1433 = vld [vmem:[%s11 + $0x114] sm:$0xff]
  %v1434 = vld [vmem:[%s11 + $0x11c] sm:$0xf]
  %v1435 = vld [vmem:[%s11 + $0x120] sm:$0xff]
  %v1436 = vld [vmem:[%s11 + $0x128] sm:$0xf]
  %v1437 = vld [vmem:[%s11 + $0x12c] sm:$0xff]
  %v1438 = vld [vmem:[%s11 + $0x134] sm:$0xf]
  %v1439 = vld [vmem:[%s11 + $0x138] sm:$0xff]
  %v1440 = vld [vmem:[%s11 + $0x140] sm:$0xf]
  %v1441 = vld [vmem:[%s11 + $0x144] sm:$0xff]
  %v1442 = vld [vmem:[%s11 + $0x14c] sm:$0xf]
  %v1443 = vld [vmem:[%s11 + $0x150] sm:$0xff]
  %v1444 = vld [vmem:[%s11 + $0x158] sm:$0xf]
  %v1445 = vld [vmem:[%s11 + $0x15c] sm:$0xff]
  %v1446 = vld [vmem:[%s11 + $0x164] sm:$0xf]
  %v1447 = vld [vmem:[%s11 + $0x168] sm:$0xff]
  %v1448 = vld [vmem:[%s11 + $0x170] sm:$0xf]
  %v1449 = vld [vmem:[%s11 + $0x174] sm:$0xff]
  %v1450 = vld [vmem:[%s11 + $0x17c] sm:$0xf]
  %v1451 = vld [vmem:[%s11 + $0x180] sm:$0xff]
  %v1452 = vld [vmem:[%s11 + $0x188] sm:$0xf]
  %v1453 = vld [vmem:[%s11 + $0x18c] sm:$0xff]
  %v1454 = vld [vmem:[%s11 + $0x194] sm:$0xf]
  %v1455 = vld [vmem:[%s11 + $0x198] sm:$0xff]
  %v1456 = vld [vmem:[%s11 + $0x1a0] sm:$0xf]
  %v1457 = vld [vmem:[%s11 + $0x1a4] sm:$0xff]
  %v1458 = vld [vmem:[%s11 + $0x1ac] sm:$0xf]
  %v1459 = vld [vmem:[%s11 + $0x1b0] sm:$0xff]
  %v1460 = vld [vmem:[%s11 + $0x1b8] sm:$0xf]
  %v1461 = vld [vmem:[%s11 + $0x1bc] sm:$0xff]
  %v1462 = vld [vmem:[%s11 + $0x1c4] sm:$0xf]
  %v1463 = vld [vmem:[%s11 + $0x1c8] sm:$0xff]
  %v1464 = vld [vmem:[%s11 + $0x1d0] sm:$0xf]
  %v1465 = vld [vmem:[%s11 + $0x1d4] sm:$0xff]
  %v1466 = vld [vmem:[%s11 + $0x1dc] sm:$0xf]
  %v1467 = vld [vmem:[%s11 + $0x1e0] sm:$0xff]
  %v1468 = vld [vmem:[%s11 + $0x1e8] sm:$0xf]
  %v1469 = vld [vmem:[%s11 + $0x1ec] sm:$0xff]
  %v1470 = vld [vmem:[%s11 + $0x1f4] sm:$0xf]
  %v1471 = vld [vmem:[%s11 + $0x1f8] sm:$0xff]
  %v1472 = vld [vmem:[%s11 + $0x200] sm:$0xf]
  %v1473 = vld [vmem:[%s11 + $0x204] sm:$0xff]
  %v1474 = vld [vmem:[%s11 + $0x20c] sm:$0xf]
  %v1475 = vld [vmem:[%s11 + $0x210] sm:$0xff]
  %v1476 = vld [vmem:[%s11 + $0x218] sm:$0xf]
  %v1477 = vld [vmem:[%s11 + $0x21c] sm:$0xff]
  %v1478 = vld [vmem:[%s11 + $0x224] sm:$0xf]
  %v1479 = vld [vmem:[%s11 + $0x228] sm:$0xff]
  %v1480 = vld [vmem:[%s11 + $0x230] sm:$0xf]
  %v1481 = vld [vmem:[%s11 + $0x234] sm:$0xff]
  %v1482 = vld [vmem:[%s11 + $0x23c] sm:$0xf]
  %v1483 = vld [vmem:[%s11 + $0x240] sm:$0xff]
  %v1484 = vld [vmem:[%s11 + $0x248] sm:$0xf]
  %v1485 = vld [vmem:[%s11 + $0x24c] sm:$0xff]
  %v1486 = vld [vmem:[%s11 + $0x254] sm:$0xf]
  %v1487 = vld [vmem:[%s11 + $0x258] sm:$0xff]
  %v1488 = vld [vmem:[%s11 + $0x260] sm:$0xf]
  %v1489 = vld [vmem:[%s11 + $0x264] sm:$0xff]
  %v1490 = vld [vmem:[%s11 + $0x26c] sm:$0xf]
  %v1491 = vld [vmem:[%s11 + $0x270] sm:$0xff]
  %v1492 = vld [vmem:[%s11 + $0x278] sm:$0xf]
  %v1493 = vld [vmem:[%s11 + $0x27c] sm:$0xff]
  %v1494 = vld [vmem:[%s11 + $0x284] sm:$0xf]
  %v1495 = vld [vmem:[%s11 + $0x288] sm:$0xff]
  %v1496 = vld [vmem:[%s11 + $0x290] sm:$0xf]
  %v1497 = vld [vmem:[%s11 + $0x294] sm:$0xff]
  %v1498 = vld [vmem:[%s11 + $0x29c] sm:$0xf]
  %v1499 = vld [vmem:[%s11 + $0x2a0] sm:$0xff]
  %v1500 = vld [vmem:[%s11 + $0x2a8] sm:$0xf]
  %v1501 = vld [vmem:[%s11 + $0x2ac] sm:$0xff]
  %v1502 = vld [vmem:[%s11 + $0x2b4] sm:$0xf]
  %v1503 = vld [vmem:[%s11 + $0x2b8] sm:$0xff]
  %v1504 = vld [vmem:[%s11 + $0x2c0] sm:$0xf]
  %v1505 = vld [vmem:[%s11 + $0x2c4] sm:$0xff]
  %v1506 = vld [vmem:[%s11 + $0x2cc] sm:$0xf]
  %v1507 = vld [vmem:[%s11 + $0x2d0] sm:$0xff]
  %v1508 = vld [vmem:[%s11 + $0x2d8] sm:$0xf]
  %v1509 = vld [vmem:[%s11 + $0x2dc] sm:$0xff]
  %v1510 = vld [vmem:[%s11 + $0x2e4] sm:$0xf]
  %v1511 = vld [vmem:[%s11 + $0x2e8] sm:$0xff]
  %v1512 = vld [vmem:[%s11 + $0x2f0] sm:$0xf]
  %v1513 = vld [vmem:[%s11 + $0x2f4] sm:$0xff]
  %v1514 = vld [vmem:[%s11 + $0x2fc] sm:$0xf]
  %v1515 = vld [vmem:[%s11 + $0x300] sm:$0xff]
  %v1516 = vld [vmem:[%s11 + $0x308] sm:$0xf]
  %v1517 = vld [vmem:[%s11 + $0x30c] sm:$0xff]
  %v1518 = vld [vmem:[%s11 + $0x314] sm:$0xf]
  %v1519 = vld [vmem:[%s11 + $0x318] sm:$0xff]
  %v1520 = vld [vmem:[%s11 + $0x320] sm:$0xf]
  %v1521 = vld [vmem:[%s11 + $0x324] sm:$0xff]
  %v1522 = vld [vmem:[%s11 + $0x32c] sm:$0xf]
  %v1523 = vld [vmem:[%s11 + $0x330] sm:$0xff]
  %v1524 = vld [vmem:[%s11 + $0x338] sm:$0xf]
  %v1525 = vld [vmem:[%s11 + $0x33c] sm:$0xff]
  %v1526 = vld [vmem:[%s11 + $0x344] sm:$0xf]
  %v1527 = vld [vmem:[%s11 + $0x348] sm:$0xff]
  %v1528 = vld [vmem:[%s11 + $0x350] sm:$0xf]
  %v1529 = vld [vmem:[%s11 + $0x354] sm:$0xff]
  %v1530 = vld [vmem:[%s11 + $0x35c] sm:$0xf]
  %v1531 = vld [vmem:[%s11 + $0x360] sm:$0xff]
  %v1532 = vld [vmem:[%s11 + $0x368] sm:$0xf]
  %v1533 = vld [vmem:[%s11 + $0x36c] sm:$0xff]
  %v1534 = vld [vmem:[%s11 + $0x374] sm:$0xf]
  %v1535 = vld [vmem:[%s11 + $0x378] sm:$0xff]
  %v1536 = vld [vmem:[%s11 + $0x380] sm:$0xf]
  %v1537 = vld [vmem:[%s11 + $0x384] sm:$0xff]
  %v1538 = vld [vmem:[%s11 + $0x38c] sm:$0xf]
  %v1539 = vld [vmem:[%s11 + $0x390] sm:$0xff]
  %v1540 = vld [vmem:[%s11 + $0x398] sm:$0xf]
  %v1541 = vld [vmem:[%s11 + $0x39c] sm:$0xff]
  %v1542 = vld [vmem:[%s11 + $0x3a4] sm:$0xf]
  %v1543 = vld [vmem:[%s11 + $0x3a8] sm:$0xff]
  %v1544 = vld [vmem:[%s11 + $0x3b0] sm:$0xf]
  %v1545 = vld [vmem:[%s11 + $0x3b4] sm:$0xff]
  %v1546 = vld [vmem:[%s11 + $0x3bc] sm:$0xf]
  %v1547 = vld [vmem:[%s11 + $0x3c0] sm:$0xff]
  %v1548 = vld [vmem:[%s11 + $0x3c8] sm:$0xf]
  %v1549 = vld [vmem:[%s11 + $0x3cc] sm:$0xff]
  %v1550 = vld [vmem:[%s11 + $0x3d4] sm:$0xf]
  %v1551 = vld [vmem:[%s11 + $0x3d8] sm:$0xff]
  %v1552 = vld [vmem:[%s11 + $0x3e0] sm:$0xf]
  %v1553 = vld [vmem:[%s11 + $0x3e4] sm:$0xff]
  %v1554 = vld [vmem:[%s11 + $0x3ec] sm:$0xf]
  %v1555 = vld [vmem:[%s11 + $0x3f0] sm:$0xff]
  %v1556 = vld [vmem:[%s11 + $0x3f8] sm:$0xf]
  %v1557 = vld [vmem:[%s11 + $0x3fc] sm:$0xff]
  %v1558 = vld [vmem:[%s11 + $0x404] sm:$0xf]
  %v1559 = vld [vmem:[%s11 + $0x408] sm:$0xff]
  %v1560 = vld [vmem:[%s11 + $0x410] sm:$0xf]
  %v1561 = vld [vmem:[%s11 + $0x414] sm:$0xff]
  %v1562 = vld [vmem:[%s11 + $0x41c] sm:$0xf]
  %v1563 = vld [vmem:[%s11 + $0x420] sm:$0xff]
  %v1564 = vld [vmem:[%s11 + $0x428] sm:$0xf]
  %v1565 = vld [vmem:[%s11 + $0x42c] sm:$0xff]
  %v1566 = vld [vmem:[%s11 + $0x434] sm:$0xf]
  %v1567 = vld [vmem:[%s11 + $0x438] sm:$0xff]
  %v1568 = vld [vmem:[%s11 + $0x440] sm:$0xf]
  %v1569 = vld [vmem:[%s11 + $0x444] sm:$0xff]
  %v1570 = vld [vmem:[%s11 + $0x44c] sm:$0xf]
  %v1571 = vld [vmem:[%s11 + $0x450] sm:$0xff]
  %v1572 = vld [vmem:[%s11 + $0x458] sm:$0xf]
  %v1573 = vld [vmem:[%s11 + $0x45c] sm:$0xff]
  %v1574 = vld [vmem:[%s11 + $0x464] sm:$0xf]
  %v1575 = vld [vmem:[%s11 + $0x468] sm:$0xff]
  %v1576 = vld [vmem:[%s11 + $0x470] sm:$0xf]
  %v1577 = vld [vmem:[%s11 + $0x474] sm:$0xff]
  %v1578 = vld [vmem:[%s11 + $0x47c] sm:$0xf]
  %v1579 = vld [vmem:[%s12] sm:$0x7]
  %v1581 = vlaneseq
  %v1582 = vshrl.u32 %v1581, 7
  %v1583 = vsub.s32 0, %v1582
  %v1584 = vrot.slane %v1579, %v1583
  %v1585 = vlaneseq
  %v1586 = vshrl.u32 %v1585, 7
  %v1587 = vsub.s32 1, %v1586
  %v1588 = vrot.slane %v1579, %v1587
  %v1589 = vlaneseq
  %v1590 = vshrl.u32 %v1589, 7
  %v1591 = vsub.s32 2, %v1590
  %v1592 = vrot.slane %v1579, %v1591
  %v1788 = vunpack.c.l.b16 %v1387
  %v1789 = vunpack.c.h.b16 %v1387
  %v1790 = vunpack.c.l.b16 %v1388
  %v1791 = vunpack.c.l.b16 %v1389
  %v1792 = vunpack.c.h.b16 %v1389
  %v1793 = vunpack.c.l.b16 %v1390
  %v1794 = vunpack.c.l.b16 %v1391
  %v1795 = vunpack.c.h.b16 %v1391
  %v1796 = vunpack.c.l.b16 %v1392
  %v1797 = vunpack.c.l.b16 %v1393
  %v1798 = vunpack.c.h.b16 %v1393
  %v1799 = vunpack.c.l.b16 %v1394
  %v1800 = vunpack.c.l.b16 %v1395
  %v1801 = vunpack.c.h.b16 %v1395
  %v1802 = vunpack.c.l.b16 %v1396
  %v1803 = vunpack.c.l.b16 %v1397
  %v1804 = vunpack.c.h.b16 %v1397
  %v1805 = vunpack.c.l.b16 %v1398
  %v1806 = vunpack.c.l.b16 %v1399
  %v1807 = vunpack.c.h.b16 %v1399
  %v1808 = vunpack.c.l.b16 %v1400
  %v1809 = vunpack.c.l.b16 %v1401
  %v1810 = vunpack.c.h.b16 %v1401
  %v1811 = vunpack.c.l.b16 %v1402
  %v1812 = vunpack.c.l.b16 %v1403
  %v1813 = vunpack.c.h.b16 %v1403
  %v1814 = vunpack.c.l.b16 %v1404
  %v1815 = vunpack.c.l.b16 %v1405
  %v1816 = vunpack.c.h.b16 %v1405
  %v1817 = vunpack.c.l.b16 %v1406
  %v1818 = vunpack.c.l.b16 %v1407
  %v1819 = vunpack.c.h.b16 %v1407
  %v1820 = vunpack.c.l.b16 %v1408
  %v1821 = vunpack.c.l.b16 %v1409
  %v1822 = vunpack.c.h.b16 %v1409
  %v1823 = vunpack.c.l.b16 %v1410
  %v1824 = vunpack.c.l.b16 %v1411
  %v1825 = vunpack.c.h.b16 %v1411
  %v1826 = vunpack.c.l.b16 %v1412
  %v1827 = vunpack.c.l.b16 %v1413
  %v1828 = vunpack.c.h.b16 %v1413
  %v1829 = vunpack.c.l.b16 %v1414
  %v1830 = vunpack.c.l.b16 %v1415
  %v1831 = vunpack.c.h.b16 %v1415
  %v1832 = vunpack.c.l.b16 %v1416
  %v1833 = vunpack.c.l.b16 %v1417
  %v1834 = vunpack.c.h.b16 %v1417
  %v1835 = vunpack.c.l.b16 %v1418
  %v1836 = vunpack.c.l.b16 %v1419
  %v1837 = vunpack.c.h.b16 %v1419
  %v1838 = vunpack.c.l.b16 %v1420
  %v1839 = vunpack.c.l.b16 %v1421
  %v1840 = vunpack.c.h.b16 %v1421
  %v1841 = vunpack.c.l.b16 %v1422
  %v1842 = vunpack.c.l.b16 %v1423
  %v1843 = vunpack.c.h.b16 %v1423
  %v1844 = vunpack.c.l.b16 %v1424
  %v1845 = vunpack.c.l.b16 %v1425
  %v1846 = vunpack.c.h.b16 %v1425
  %v1847 = vunpack.c.l.b16 %v1426
  %v1848 = vunpack.c.l.b16 %v1427
  %v1849 = vunpack.c.h.b16 %v1427
  %v1850 = vunpack.c.l.b16 %v1428
  %v1851 = vunpack.c.l.b16 %v1429
  %v1852 = vunpack.c.h.b16 %v1429
  %v1853 = vunpack.c.l.b16 %v1430
  %v1854 = vunpack.c.l.b16 %v1431
  %v1855 = vunpack.c.h.b16 %v1431
  %v1856 = vunpack.c.l.b16 %v1432
  %v1857 = vunpack.c.l.b16 %v1433
  %v1858 = vunpack.c.h.b16 %v1433
  %v1859 = vunpack.c.l.b16 %v1434
  %v1860 = vunpack.c.l.b16 %v1435
  %v1861 = vunpack.c.h.b16 %v1435
  %v1862 = vunpack.c.l.b16 %v1436
  %v1863 = vunpack.c.l.b16 %v1437
  %v1864 = vunpack.c.h.b16 %v1437
  %v1865 = vunpack.c.l.b16 %v1438
  %v1866 = vunpack.c.l.b16 %v1439
  %v1867 = vunpack.c.h.b16 %v1439
  %v1868 = vunpack.c.l.b16 %v1440
  %v1869 = vunpack.c.l.b16 %v1441
  %v1870 = vunpack.c.h.b16 %v1441
  %v1871 = vunpack.c.l.b16 %v1442
  %v1872 = vunpack.c.l.b16 %v1443
  %v1873 = vunpack.c.h.b16 %v1443
  %v1874 = vunpack.c.l.b16 %v1444
  %v1875 = vunpack.c.l.b16 %v1445
  %v1876 = vunpack.c.h.b16 %v1445
  %v1877 = vunpack.c.l.b16 %v1446
  %v1878 = vunpack.c.l.b16 %v1447
  %v1879 = vunpack.c.h.b16 %v1447
  %v1880 = vunpack.c.l.b16 %v1448
  %v1881 = vunpack.c.l.b16 %v1449
  %v1882 = vunpack.c.h.b16 %v1449
  %v1883 = vunpack.c.l.b16 %v1450
  %v1884 = vunpack.c.l.b16 %v1451
  %v1885 = vunpack.c.h.b16 %v1451
  %v1886 = vunpack.c.l.b16 %v1452
  %v1887 = vunpack.c.l.b16 %v1453
  %v1888 = vunpack.c.h.b16 %v1453
  %v1889 = vunpack.c.l.b16 %v1454
  %v1890 = vunpack.c.l.b16 %v1455
  %v1891 = vunpack.c.h.b16 %v1455
  %v1892 = vunpack.c.l.b16 %v1456
  %v1893 = vunpack.c.l.b16 %v1457
  %v1894 = vunpack.c.h.b16 %v1457
  %v1895 = vunpack.c.l.b16 %v1458
  %v1896 = vunpack.c.l.b16 %v1459
  %v1897 = vunpack.c.h.b16 %v1459
  %v1898 = vunpack.c.l.b16 %v1460
  %v1899 = vunpack.c.l.b16 %v1461
  %v1900 = vunpack.c.h.b16 %v1461
  %v1901 = vunpack.c.l.b16 %v1462
  %v1902 = vunpack.c.l.b16 %v1463
  %v1903 = vunpack.c.h.b16 %v1463
  %v1904 = vunpack.c.l.b16 %v1464
  %v1905 = vunpack.c.l.b16 %v1465
  %v1906 = vunpack.c.h.b16 %v1465
  %v1907 = vunpack.c.l.b16 %v1466
  %v1908 = vunpack.c.l.b16 %v1467
  %v1909 = vunpack.c.h.b16 %v1467
  %v1910 = vunpack.c.l.b16 %v1468
  %v1911 = vunpack.c.l.b16 %v1469
  %v1912 = vunpack.c.h.b16 %v1469
  %v1913 = vunpack.c.l.b16 %v1470
  %v1914 = vunpack.c.l.b16 %v1471
  %v1915 = vunpack.c.h.b16 %v1471
  %v1916 = vunpack.c.l.b16 %v1472
  %v1917 = vunpack.c.l.b16 %v1473
  %v1918 = vunpack.c.h.b16 %v1473
  %v1919 = vunpack.c.l.b16 %v1474
  %v1920 = vunpack.c.l.b16 %v1475
  %v1921 = vunpack.c.h.b16 %v1475
  %v1922 = vunpack.c.l.b16 %v1476
  %v1923 = vunpack.c.l.b16 %v1477
  %v1924 = vunpack.c.h.b16 %v1477
  %v1925 = vunpack.c.l.b16 %v1478
  %v1926 = vunpack.c.l.b16 %v1479
  %v1927 = vunpack.c.h.b16 %v1479
  %v1928 = vunpack.c.l.b16 %v1480
  %v1929 = vunpack.c.l.b16 %v1481
  %v1930 = vunpack.c.h.b16 %v1481
  %v1931 = vunpack.c.l.b16 %v1482
  %v1932 = vunpack.c.l.b16 %v1483
  %v1933 = vunpack.c.h.b16 %v1483
  %v1934 = vunpack.c.l.b16 %v1484
  %v1935 = vunpack.c.l.b16 %v1485
  %v1936 = vunpack.c.h.b16 %v1485
  %v1937 = vunpack.c.l.b16 %v1486
  %v1938 = vunpack.c.l.b16 %v1487
  %v1939 = vunpack.c.h.b16 %v1487
  %v1940 = vunpack.c.l.b16 %v1488
  %v1941 = vunpack.c.l.b16 %v1489
  %v1942 = vunpack.c.h.b16 %v1489
  %v1943 = vunpack.c.l.b16 %v1490
  %v1944 = vunpack.c.l.b16 %v1491
  %v1945 = vunpack.c.h.b16 %v1491
  %v1946 = vunpack.c.l.b16 %v1492
  %v1947 = vunpack.c.l.b16 %v1493
  %v1948 = vunpack.c.h.b16 %v1493
  %v1949 = vunpack.c.l.b16 %v1494
  %v1950 = vunpack.c.l.b16 %v1495
  %v1951 = vunpack.c.h.b16 %v1495
  %v1952 = vunpack.c.l.b16 %v1496
  %v1953 = vunpack.c.l.b16 %v1497
  %v1954 = vunpack.c.h.b16 %v1497
  %v1955 = vunpack.c.l.b16 %v1498
  %v1956 = vunpack.c.l.b16 %v1499
  %v1957 = vunpack.c.h.b16 %v1499
  %v1958 = vunpack.c.l.b16 %v1500
  %v1959 = vunpack.c.l.b16 %v1501
  %v1960 = vunpack.c.h.b16 %v1501
  %v1961 = vunpack.c.l.b16 %v1502
  %v1962 = vunpack.c.l.b16 %v1503
  %v1963 = vunpack.c.h.b16 %v1503
  %v1964 = vunpack.c.l.b16 %v1504
  %v1965 = vunpack.c.l.b16 %v1505
  %v1966 = vunpack.c.h.b16 %v1505
  %v1967 = vunpack.c.l.b16 %v1506
  %v1968 = vunpack.c.l.b16 %v1507
  %v1969 = vunpack.c.h.b16 %v1507
  %v1970 = vunpack.c.l.b16 %v1508
  %v1971 = vunpack.c.l.b16 %v1509
  %v1972 = vunpack.c.h.b16 %v1509
  %v1973 = vunpack.c.l.b16 %v1510
  %v1974 = vunpack.c.l.b16 %v1511
  %v1975 = vunpack.c.h.b16 %v1511
  %v1976 = vunpack.c.l.b16 %v1512
  %v1977 = vunpack.c.l.b16 %v1513
  %v1978 = vunpack.c.h.b16 %v1513
  %v1979 = vunpack.c.l.b16 %v1514
  %v1980 = vunpack.c.l.b16 %v1515
  %v1981 = vunpack.c.h.b16 %v1515
  %v1982 = vunpack.c.l.b16 %v1516
  %v1983 = vunpack.c.l.b16 %v1517
  %v1984 = vunpack.c.h.b16 %v1517
  %v1985 = vunpack.c.l.b16 %v1518
  %v1986 = vunpack.c.l.b16 %v1519
  %v1987 = vunpack.c.h.b16 %v1519
  %v1988 = vunpack.c.l.b16 %v1520
  %v1989 = vunpack.c.l.b16 %v1521
  %v1990 = vunpack.c.h.b16 %v1521
  %v1991 = vunpack.c.l.b16 %v1522
  %v1992 = vunpack.c.l.b16 %v1523
  %v1993 = vunpack.c.h.b16 %v1523
  %v1994 = vunpack.c.l.b16 %v1524
  %v1995 = vunpack.c.l.b16 %v1525
  %v1996 = vunpack.c.h.b16 %v1525
  %v1997 = vunpack.c.l.b16 %v1526
  %v1998 = vunpack.c.l.b16 %v1527
  %v1999 = vunpack.c.h.b16 %v1527
  %v2000 = vunpack.c.l.b16 %v1528
  %v2001 = vunpack.c.l.b16 %v1529
  %v2002 = vunpack.c.h.b16 %v1529
  %v2003 = vunpack.c.l.b16 %v1530
  %v2004 = vunpack.c.l.b16 %v1531
  %v2005 = vunpack.c.h.b16 %v1531
  %v2006 = vunpack.c.l.b16 %v1532
  %v2007 = vunpack.c.l.b16 %v1533
  %v2008 = vunpack.c.h.b16 %v1533
  %v2009 = vunpack.c.l.b16 %v1534
  %v2010 = vunpack.c.l.b16 %v1535
  %v2011 = vunpack.c.h.b16 %v1535
  %v2012 = vunpack.c.l.b16 %v1536
  %v2013 = vunpack.c.l.b16 %v1537
  %v2014 = vunpack.c.h.b16 %v1537
  %v2015 = vunpack.c.l.b16 %v1538
  %v2016 = vunpack.c.l.b16 %v1539
  %v2017 = vunpack.c.h.b16 %v1539
  %v2018 = vunpack.c.l.b16 %v1540
  %v2019 = vunpack.c.l.b16 %v1541
  %v2020 = vunpack.c.h.b16 %v1541
  %v2021 = vunpack.c.l.b16 %v1542
  %v2022 = vunpack.c.l.b16 %v1543
  %v2023 = vunpack.c.h.b16 %v1543
  %v2024 = vunpack.c.l.b16 %v1544
  %v2025 = vunpack.c.l.b16 %v1545
  %v2026 = vunpack.c.h.b16 %v1545
  %v2027 = vunpack.c.l.b16 %v1546
  %v2028 = vunpack.c.l.b16 %v1547
  %v2029 = vunpack.c.h.b16 %v1547
  %v2030 = vunpack.c.l.b16 %v1548
  %v2031 = vunpack.c.l.b16 %v1549
  %v2032 = vunpack.c.h.b16 %v1549
  %v2033 = vunpack.c.l.b16 %v1550
  %v2034 = vunpack.c.l.b16 %v1551
  %v2035 = vunpack.c.h.b16 %v1551
  %v2036 = vunpack.c.l.b16 %v1552
  %v2037 = vunpack.c.l.b16 %v1553
  %v2038 = vunpack.c.h.b16 %v1553
  %v2039 = vunpack.c.l.b16 %v1554
  %v2040 = vunpack.c.l.b16 %v1555
  %v2041 = vunpack.c.h.b16 %v1555
  %v2042 = vunpack.c.l.b16 %v1556
  %v2043 = vunpack.c.l.b16 %v1557
  %v2044 = vunpack.c.h.b16 %v1557
  %v2045 = vunpack.c.l.b16 %v1558
  %v2046 = vunpack.c.l.b16 %v1559
  %v2047 = vunpack.c.h.b16 %v1559
  %v2048 = vunpack.c.l.b16 %v1560
  %v2049 = vunpack.c.l.b16 %v1561
  %v2050 = vunpack.c.h.b16 %v1561
  %v2051 = vunpack.c.l.b16 %v1562
  %v2052 = vunpack.c.l.b16 %v1563
  %v2053 = vunpack.c.h.b16 %v1563
  %v2054 = vunpack.c.l.b16 %v1564
  %v2055 = vunpack.c.l.b16 %v1565
  %v2056 = vunpack.c.h.b16 %v1565
  %v2057 = vunpack.c.l.b16 %v1566
  %v2058 = vunpack.c.l.b16 %v1567
  %v2059 = vunpack.c.h.b16 %v1567
  %v2060 = vunpack.c.l.b16 %v1568
  %v2061 = vunpack.c.l.b16 %v1569
  %v2062 = vunpack.c.h.b16 %v1569
  %v2063 = vunpack.c.l.b16 %v1570
  %v2064 = vunpack.c.l.b16 %v1571
  %v2065 = vunpack.c.h.b16 %v1571
  %v2066 = vunpack.c.l.b16 %v1572
  %v2067 = vunpack.c.l.b16 %v1573
  %v2068 = vunpack.c.h.b16 %v1573
  %v2069 = vunpack.c.l.b16 %v1574
  %v2070 = vunpack.c.l.b16 %v1575
  %v2071 = vunpack.c.h.b16 %v1575
  %v2072 = vunpack.c.l.b16 %v1576
  %v2073 = vunpack.c.l.b16 %v1577
  %v2074 = vunpack.c.h.b16 %v1577
  %v2075 = vunpack.c.l.b16 %v1578
  %v2076 = vpack.c.b16 %v1791, %v1788
  %v2077 = vpack.c.b16 %v1792, %v1789
  %v2078 = vpack.c.b16 %v1793, %v1790
  %v2079 = vpack.c.b16 %v1797, %v1794
  %v2080 = vpack.c.b16 %v1798, %v1795
  %v2081 = vpack.c.b16 %v1799, %v1796
  %v2082 = vpack.c.b16 %v1803, %v1800
  %v2083 = vpack.c.b16 %v1804, %v1801
  %v2084 = vpack.c.b16 %v1805, %v1802
  %v2085 = vpack.c.b16 %v1809, %v1806
  %v2086 = vpack.c.b16 %v1810, %v1807
  %v2087 = vpack.c.b16 %v1811, %v1808
  %v2088 = vpack.c.b16 %v1815, %v1812
  %v2089 = vpack.c.b16 %v1816, %v1813
  %v2090 = vpack.c.b16 %v1817, %v1814
  %v2091 = vpack.c.b16 %v1821, %v1818
  %v2092 = vpack.c.b16 %v1822, %v1819
  %v2093 = vpack.c.b16 %v1823, %v1820
  %v2094 = vpack.c.b16 %v1827, %v1824
  %v2095 = vpack.c.b16 %v1828, %v1825
  %v2096 = vpack.c.b16 %v1829, %v1826
  %v2097 = vpack.c.b16 %v1833, %v1830
  %v2098 = vpack.c.b16 %v1834, %v1831
  %v2099 = vpack.c.b16 %v1835, %v1832
  %v2100 = vpack.c.b16 %v1839, %v1836
  %v2101 = vpack.c.b16 %v1840, %v1837
  %v2102 = vpack.c.b16 %v1841, %v1838
  %v2103 = vpack.c.b16 %v1845, %v1842
  %v2104 = vpack.c.b16 %v1846, %v1843
  %v2105 = vpack.c.b16 %v1847, %v1844
  %v2106 = vpack.c.b16 %v1851, %v1848
  %v2107 = vpack.c.b16 %v1852, %v1849
  %v2108 = vpack.c.b16 %v1853, %v1850
  %v2109 = vpack.c.b16 %v1857, %v1854
  %v2110 = vpack.c.b16 %v1858, %v1855
  %v2111 = vpack.c.b16 %v1859, %v1856
  %v2112 = vpack.c.b16 %v1863, %v1860
  %v2113 = vpack.c.b16 %v1864, %v1861
  %v2114 = vpack.c.b16 %v1865, %v1862
  %v2115 = vpack.c.b16 %v1869, %v1866
  %v2116 = vpack.c.b16 %v1870, %v1867
  %v2117 = vpack.c.b16 %v1871, %v1868
  %v2118 = vpack.c.b16 %v1875, %v1872
  %v2119 = vpack.c.b16 %v1876, %v1873
  %v2120 = vpack.c.b16 %v1877, %v1874
  %v2121 = vpack.c.b16 %v1881, %v1878
  %v2122 = vpack.c.b16 %v1882, %v1879
  %v2123 = vpack.c.b16 %v1883, %v1880
  %v2124 = vpack.c.b16 %v1887, %v1884
  %v2125 = vpack.c.b16 %v1888, %v1885
  %v2126 = vpack.c.b16 %v1889, %v1886
  %v2127 = vpack.c.b16 %v1893, %v1890
  %v2128 = vpack.c.b16 %v1894, %v1891
  %v2129 = vpack.c.b16 %v1895, %v1892
  %v2130 = vpack.c.b16 %v1899, %v1896
  %v2131 = vpack.c.b16 %v1900, %v1897
  %v2132 = vpack.c.b16 %v1901, %v1898
  %v2133 = vpack.c.b16 %v1905, %v1902
  %v2134 = vpack.c.b16 %v1906, %v1903
  %v2135 = vpack.c.b16 %v1907, %v1904
  %v2136 = vpack.c.b16 %v1911, %v1908
  %v2137 = vpack.c.b16 %v1912, %v1909
  %v2138 = vpack.c.b16 %v1913, %v1910
  %v2139 = vpack.c.b16 %v1917, %v1914
  %v2140 = vpack.c.b16 %v1918, %v1915
  %v2141 = vpack.c.b16 %v1919, %v1916
  %v2142 = vpack.c.b16 %v1923, %v1920
  %v2143 = vpack.c.b16 %v1924, %v1921
  %v2144 = vpack.c.b16 %v1925, %v1922
  %v2145 = vpack.c.b16 %v1929, %v1926
  %v2146 = vpack.c.b16 %v1930, %v1927
  %v2147 = vpack.c.b16 %v1931, %v1928
  %v2148 = vpack.c.b16 %v1935, %v1932
  %v2149 = vpack.c.b16 %v1936, %v1933
  %v2150 = vpack.c.b16 %v1937, %v1934
  %v2151 = vpack.c.b16 %v1941, %v1938
  %v2152 = vpack.c.b16 %v1942, %v1939
  %v2153 = vpack.c.b16 %v1943, %v1940
  %v2154 = vpack.c.b16 %v1947, %v1944
  %v2155 = vpack.c.b16 %v1948, %v1945
  %v2156 = vpack.c.b16 %v1949, %v1946
  %v2157 = vpack.c.b16 %v1953, %v1950
  %v2158 = vpack.c.b16 %v1954, %v1951
  %v2159 = vpack.c.b16 %v1955, %v1952
  %v2160 = vpack.c.b16 %v1959, %v1956
  %v2161 = vpack.c.b16 %v1960, %v1957
  %v2162 = vpack.c.b16 %v1961, %v1958
  %v2163 = vpack.c.b16 %v1965, %v1962
  %v2164 = vpack.c.b16 %v1966, %v1963
  %v2165 = vpack.c.b16 %v1967, %v1964
  %v2166 = vpack.c.b16 %v1971, %v1968
  %v2167 = vpack.c.b16 %v1972, %v1969
  %v2168 = vpack.c.b16 %v1973, %v1970
  %v2169 = vpack.c.b16 %v1977, %v1974
  %v2170 = vpack.c.b16 %v1978, %v1975
  %v2171 = vpack.c.b16 %v1979, %v1976
  %v2172 = vpack.c.b16 %v1983, %v1980
  %v2173 = vpack.c.b16 %v1984, %v1981
  %v2174 = vpack.c.b16 %v1985, %v1982
  %v2175 = vpack.c.b16 %v1989, %v1986
  %v2176 = vpack.c.b16 %v1990, %v1987
  %v2177 = vpack.c.b16 %v1991, %v1988
  %v2178 = vpack.c.b16 %v1995, %v1992
  %v2179 = vpack.c.b16 %v1996, %v1993
  %v2180 = vpack.c.b16 %v1997, %v1994
  %v2181 = vpack.c.b16 %v2001, %v1998
  %v2182 = vpack.c.b16 %v2002, %v1999
  %v2183 = vpack.c.b16 %v2003, %v2000
  %v2184 = vpack.c.b16 %v2007, %v2004
  %v2185 = vpack.c.b16 %v2008, %v2005
  %v2186 = vpack.c.b16 %v2009, %v2006
  %v2187 = vpack.c.b16 %v2013, %v2010
  %v2188 = vpack.c.b16 %v2014, %v2011
  %v2189 = vpack.c.b16 %v2015, %v2012
  %v2190 = vpack.c.b16 %v2019, %v2016
  %v2191 = vpack.c.b16 %v2020, %v2017
  %v2192 = vpack.c.b16 %v2021, %v2018
  %v2193 = vpack.c.b16 %v2025, %v2022
  %v2194 = vpack.c.b16 %v2026, %v2023
  %v2195 = vpack.c.b16 %v2027, %v2024
  %v2196 = vpack.c.b16 %v2031, %v2028
  %v2197 = vpack.c.b16 %v2032, %v2029
  %v2198 = vpack.c.b16 %v2033, %v2030
  %v2199 = vpack.c.b16 %v2037, %v2034
  %v2200 = vpack.c.b16 %v2038, %v2035
  %v2201 = vpack.c.b16 %v2039, %v2036
  %v2202 = vpack.c.b16 %v2043, %v2040
  %v2203 = vpack.c.b16 %v2044, %v2041
  %v2204 = vpack.c.b16 %v2045, %v2042
  %v2205 = vpack.c.b16 %v2049, %v2046
  %v2206 = vpack.c.b16 %v2050, %v2047
  %v2207 = vpack.c.b16 %v2051, %v2048
  %v2208 = vpack.c.b16 %v2055, %v2052
  %v2209 = vpack.c.b16 %v2056, %v2053
  %v2210 = vpack.c.b16 %v2057, %v2054
  %v2211 = vpack.c.b16 %v2061, %v2058
  %v2212 = vpack.c.b16 %v2062, %v2059
  %v2213 = vpack.c.b16 %v2063, %v2060
  %v2214 = vpack.c.b16 %v2067, %v2064
  %v2215 = vpack.c.b16 %v2068, %v2065
  %v2216 = vpack.c.b16 %v2069, %v2066
  %v2217 = vpack.c.b16 %v2073, %v2070
  %v2218 = vpack.c.b16 %v2074, %v2071
  %v2219 = vpack.c.b16 %v2075, %v2072
  %2364 = vmatprep.subr.bf16.mxu0 %v2098
  %2365 = vmatpush1.bf16.msra.mxu0 %v2097
  %2366 = vmatprep.subr.bf16.mxu0 %v2095
  %2367 = vmatpush1.bf16.msra.mxu0 %v2094
  %2368 = vmatprep.subr.bf16.mxu0 %v2092
  %2369 = vmatpush1.bf16.msra.mxu0 %v2091
  %2370 = vmatprep.subr.bf16.mxu0 %v2089
  %2371 = vmatpush1.bf16.msra.mxu0 %v2088
  %2372 = vmatprep.subr.bf16.mxu0 %v2086
  %2373 = vmatpush1.bf16.msra.mxu0 %v2085
  %2374 = vmatprep.subr.bf16.mxu0 %v2083
  %2375 = vmatpush1.bf16.msra.mxu0 %v2082
  %2376 = vmatprep.subr.bf16.mxu0 %v2080
  %2377 = vmatpush1.bf16.msra.mxu0 %v2079
  %2378 = vmatprep.subr.bf16.mxu0 %v2077
  %2379 = vmatpush1.bf16.msra.mxu0 %v2076
  %2380 = vmatprep.subr.bf16.mxu0 %v2122
  %2381 = vmatpush2.bf16.msra.mxu0 %v2121
  %2382 = vmatprep.subr.bf16.mxu0 %v2119
  %2383 = vmatpush2.bf16.msra.mxu0 %v2118
  %2384 = vmatprep.subr.bf16.mxu0 %v2116
  %2385 = vmatpush2.bf16.msra.mxu0 %v2115
  %2386 = vmatprep.subr.bf16.mxu0 %v2113
  %2387 = vmatpush2.bf16.msra.mxu0 %v2112
  %2388 = vmatprep.subr.bf16.mxu0 %v2110
  %2389 = vmatpush2.bf16.msra.mxu0 %v2109
  %2390 = vmatprep.subr.bf16.mxu0 %v2107
  %2391 = vmatpush2.bf16.msra.mxu0 %v2106
  %2392 = vmatprep.subr.bf16.mxu0 %v2104
  %2393 = vmatpush2.bf16.msra.mxu0 %v2103
  %2394 = vmatprep.subr.bf16.mxu0 %v2101
  %2395 = vmatpush2.bf16.msra.mxu0 %v2100
  %2396 = vmatprep.mubr.bf16.mxu0 %v1382
  %2397 = vmatmul.mubr.bf16.gmra.mxu0 %v1381
  %v2398 = vpop.f32.mrf.mxu0
  %v2399 = vadd.f32 %v1584, %v2398
  %v2400 = vpop.f32.mrf.mxu0
  %v2401 = vadd.f32 %v1588, %v2400
  %v2402 = vpop.f32.mrf.mxu0
  %v2403 = vpop.f32.mrf.mxu0
  %2404 = vdwg.mxu0
  %2405 = vmatprep.subr.bf16.mxu0 %v2146
  %2406 = vmatpush1.bf16.msra.mxu0 %v2145
  %2407 = vmatprep.subr.bf16.mxu0 %v2143
  %2408 = vmatpush1.bf16.msra.mxu0 %v2142
  %2409 = vmatprep.subr.bf16.mxu0 %v2140
  %2410 = vmatpush1.bf16.msra.mxu0 %v2139
  %2411 = vmatprep.subr.bf16.mxu0 %v2137
  %2412 = vmatpush1.bf16.msra.mxu0 %v2136
  %2413 = vmatprep.subr.bf16.mxu0 %v2134
  %2414 = vmatpush1.bf16.msra.mxu0 %v2133
  %2415 = vmatprep.subr.bf16.mxu0 %v2131
  %2416 = vmatpush1.bf16.msra.mxu0 %v2130
  %2417 = vmatprep.subr.bf16.mxu0 %v2128
  %2418 = vmatpush1.bf16.msra.mxu0 %v2127
  %2419 = vmatprep.subr.bf16.mxu0 %v2125
  %2420 = vmatpush1.bf16.msra.mxu0 %v2124
  %2421 = vmatprep.subr.bf16.mxu0 %v2170
  %2422 = vmatpush2.bf16.msra.mxu0 %v2169
  %2423 = vmatprep.subr.bf16.mxu0 %v2167
  %2424 = vmatpush2.bf16.msra.mxu0 %v2166
  %2425 = vmatprep.subr.bf16.mxu0 %v2164
  %2426 = vmatpush2.bf16.msra.mxu0 %v2163
  %2427 = vmatprep.subr.bf16.mxu0 %v2161
  %2428 = vmatpush2.bf16.msra.mxu0 %v2160
  %2429 = vmatprep.subr.bf16.mxu0 %v2158
  %2430 = vmatpush2.bf16.msra.mxu0 %v2157
  %2431 = vmatprep.subr.bf16.mxu0 %v2155
  %2432 = vmatpush2.bf16.msra.mxu0 %v2154
  %2433 = vmatprep.subr.bf16.mxu0 %v2152
  %2434 = vmatpush2.bf16.msra.mxu0 %v2151
  %2435 = vmatprep.subr.bf16.mxu0 %v2149
  %2436 = vmatpush2.bf16.msra.mxu0 %v2148
  %2437 = vmatprep.mubr.bf16.mxu0 %v1384
  %2438 = vmatmul.mubr.bf16.gmra.mxu0 %v1383
  %v2439 = vpop.f32.mrf.mxu0
  %v2440 = vadd.f32 %v2399, %v2439
  %v2441 = vpop.f32.mrf.mxu0
  %v2442 = vadd.f32 %v2401, %v2441
  %v2443 = vpop.f32.mrf.mxu0
  %v2444 = vpop.f32.mrf.mxu0
  %2445 = vdwg.mxu0
  %2446 = vmatprep.subr.bf16.mxu0 %v2194
  %2447 = vmatpush1.bf16.msra.mxu0 %v2193
  %2448 = vmatprep.subr.bf16.mxu0 %v2191
  %2449 = vmatpush1.bf16.msra.mxu0 %v2190
  %2450 = vmatprep.subr.bf16.mxu0 %v2188
  %2451 = vmatpush1.bf16.msra.mxu0 %v2187
  %2452 = vmatprep.subr.bf16.mxu0 %v2185
  %2453 = vmatpush1.bf16.msra.mxu0 %v2184
  %2454 = vmatprep.subr.bf16.mxu0 %v2182
  %2455 = vmatpush1.bf16.msra.mxu0 %v2181
  %2456 = vmatprep.subr.bf16.mxu0 %v2179
  %2457 = vmatpush1.bf16.msra.mxu0 %v2178
  %2458 = vmatprep.subr.bf16.mxu0 %v2176
  %2459 = vmatpush1.bf16.msra.mxu0 %v2175
  %2460 = vmatprep.subr.bf16.mxu0 %v2173
  %2461 = vmatpush1.bf16.msra.mxu0 %v2172
  %2462 = vmatprep.subr.bf16.mxu0 %v2218
  %2463 = vmatpush2.bf16.msra.mxu0 %v2217
  %2464 = vmatprep.subr.bf16.mxu0 %v2215
  %2465 = vmatpush2.bf16.msra.mxu0 %v2214
  %2466 = vmatprep.subr.bf16.mxu0 %v2212
  %2467 = vmatpush2.bf16.msra.mxu0 %v2211
  %2468 = vmatprep.subr.bf16.mxu0 %v2209
  %2469 = vmatpush2.bf16.msra.mxu0 %v2208
  %2470 = vmatprep.subr.bf16.mxu0 %v2206
  %2471 = vmatpush2.bf16.msra.mxu0 %v2205
  %2472 = vmatprep.subr.bf16.mxu0 %v2203
  %2473 = vmatpush2.bf16.msra.mxu0 %v2202
  %2474 = vmatprep.subr.bf16.mxu0 %v2200
  %2475 = vmatpush2.bf16.msra.mxu0 %v2199
  %2476 = vmatprep.subr.bf16.mxu0 %v2197
  %2477 = vmatpush2.bf16.msra.mxu0 %v2196
  %2478 = vmatprep.mubr.bf16.mxu0 %v1386
  %2479 = vmatmul.mubr.bf16.gmra.mxu0 %v1385
  %v2480 = vpop.f32.mrf.mxu0
  %v2481 = vadd.f32 %v2440, %v2480
  %v2482 = vpop.f32.mrf.mxu0
  %v2483 = vadd.f32 %v2442, %v2482
  %v2484 = vpop.f32.mrf.mxu0
  %v2485 = vpop.f32.mrf.mxu0
  %2486 = vdwg.mxu0
  %2487 = vmatprep.subr.bf16.mxu0 0
  %2488 = vmatpush1.bf16.msra.mxu0 %v2099
  %2489 = vmatprep.subr.bf16.mxu0 0
  %2490 = vmatpush1.bf16.msra.mxu0 %v2096
  %2491 = vmatprep.subr.bf16.mxu0 0
  %2492 = vmatpush1.bf16.msra.mxu0 %v2093
  %2493 = vmatprep.subr.bf16.mxu0 0
  %2494 = vmatpush1.bf16.msra.mxu0 %v2090
  %2495 = vmatprep.subr.bf16.mxu0 0
  %2496 = vmatpush1.bf16.msra.mxu0 %v2087
  %2497 = vmatprep.subr.bf16.mxu0 0
  %2498 = vmatpush1.bf16.msra.mxu0 %v2084
  %2499 = vmatprep.subr.bf16.mxu0 0
  %2500 = vmatpush1.bf16.msra.mxu0 %v2081
  %2501 = vmatprep.subr.bf16.mxu0 0
  %2502 = vmatpush1.bf16.msra.mxu0 %v2078
  %2503 = vmatprep.subr.bf16.mxu0 0
  %2504 = vmatpush2.bf16.msra.mxu0 %v2123
  %2505 = vmatprep.subr.bf16.mxu0 0
  %2506 = vmatpush2.bf16.msra.mxu0 %v2120
  %2507 = vmatprep.subr.bf16.mxu0 0
  %2508 = vmatpush2.bf16.msra.mxu0 %v2117
  %2509 = vmatprep.subr.bf16.mxu0 0
  %2510 = vmatpush2.bf16.msra.mxu0 %v2114
  %2511 = vmatprep.subr.bf16.mxu0 0
  %2512 = vmatpush2.bf16.msra.mxu0 %v2111
  %2513 = vmatprep.subr.bf16.mxu0 0
  %2514 = vmatpush2.bf16.msra.mxu0 %v2108
  %2515 = vmatprep.subr.bf16.mxu0 0
  %2516 = vmatpush2.bf16.msra.mxu0 %v2105
  %2517 = vmatprep.subr.bf16.mxu0 0
  %2518 = vmatpush2.bf16.msra.mxu0 %v2102
  %2519 = vmatprep.mubr.bf16.mxu0 %v1382
  %2520 = vmatmul.mubr.bf16.gmra.mxu0 %v1381
  %v2521 = vpop.f32.mrf.mxu0
  %v2522 = vadd.f32 %v1592, %v2521
  %v2523 = vpop.f32.mrf.mxu0
  %v2524 = vpop.f32.mrf.mxu0
  %v2525 = vpop.f32.mrf.mxu0
  %2526 = vdwg.mxu0
  %2527 = vmatprep.subr.bf16.mxu0 0
  %2528 = vmatpush1.bf16.msra.mxu0 %v2147
  %2529 = vmatprep.subr.bf16.mxu0 0
  %2530 = vmatpush1.bf16.msra.mxu0 %v2144
  %2531 = vmatprep.subr.bf16.mxu0 0
  %2532 = vmatpush1.bf16.msra.mxu0 %v2141
  %2533 = vmatprep.subr.bf16.mxu0 0
  %2534 = vmatpush1.bf16.msra.mxu0 %v2138
  %2535 = vmatprep.subr.bf16.mxu0 0
  %2536 = vmatpush1.bf16.msra.mxu0 %v2135
  %2537 = vmatprep.subr.bf16.mxu0 0
  %2538 = vmatpush1.bf16.msra.mxu0 %v2132
  %2539 = vmatprep.subr.bf16.mxu0 0
  %2540 = vmatpush1.bf16.msra.mxu0 %v2129
  %2541 = vmatprep.subr.bf16.mxu0 0
  %2542 = vmatpush1.bf16.msra.mxu0 %v2126
  %2543 = vmatprep.subr.bf16.mxu0 0
  %2544 = vmatpush2.bf16.msra.mxu0 %v2171
  %2545 = vmatprep.subr.bf16.mxu0 0
  %2546 = vmatpush2.bf16.msra.mxu0 %v2168
  %2547 = vmatprep.subr.bf16.mxu0 0
  %2548 = vmatpush2.bf16.msra.mxu0 %v2165
  %2549 = vmatprep.subr.bf16.mxu0 0
  %2550 = vmatpush2.bf16.msra.mxu0 %v2162
  %2551 = vmatprep.subr.bf16.mxu0 0
  %2552 = vmatpush2.bf16.msra.mxu0 %v2159
  %2553 = vmatprep.subr.bf16.mxu0 0
  %2554 = vmatpush2.bf16.msra.mxu0 %v2156
  %2555 = vmatprep.subr.bf16.mxu0 0
  %2556 = vmatpush2.bf16.msra.mxu0 %v2153
  %2557 = vmatprep.subr.bf16.mxu0 0
  %2558 = vmatpush2.bf16.msra.mxu0 %v2150
  %2559 = vmatprep.mubr.bf16.mxu0 %v1384
  %2560 = vmatmul.mubr.bf16.gmra.mxu0 %v1383
  %v2561 = vpop.f32.mrf.mxu0
  %v2562 = vadd.f32 %v2522, %v2561
  %v2563 = vpop.f32.mrf.mxu0
  %v2564 = vpop.f32.mrf.mxu0
  %v2565 = vpop.f32.mrf.mxu0
  %2566 = vdwg.mxu0
  %2567 = vmatprep.subr.bf16.mxu0 0
  %2568 = vmatpush1.bf16.msra.mxu0 %v2195
  %2569 = vmatprep.subr.bf16.mxu0 0
  %2570 = vmatpush1.bf16.msra.mxu0 %v2192
  %2571 = vmatprep.subr.bf16.mxu0 0
  %2572 = vmatpush1.bf16.msra.mxu0 %v2189
  %2573 = vmatprep.subr.bf16.mxu0 0
  %2574 = vmatpush1.bf16.msra.mxu0 %v2186
  %2575 = vmatprep.subr.bf16.mxu0 0
  %2576 = vmatpush1.bf16.msra.mxu0 %v2183
  %2577 = vmatprep.subr.bf16.mxu0 0
  %2578 = vmatpush1.bf16.msra.mxu0 %v2180
  %2579 = vmatprep.subr.bf16.mxu0 0
  %2580 = vmatpush1.bf16.msra.mxu0 %v2177
  %2581 = vmatprep.subr.bf16.mxu0 0
  %2582 = vmatpush1.bf16.msra.mxu0 %v2174
  %2583 = vmatprep.subr.bf16.mxu0 0
  %2584 = vmatpush2.bf16.msra.mxu0 %v2219
  %2585 = vmatprep.subr.bf16.mxu0 0
  %2586 = vmatpush2.bf16.msra.mxu0 %v2216
  %2587 = vmatprep.subr.bf16.mxu0 0
  %2588 = vmatpush2.bf16.msra.mxu0 %v2213
  %2589 = vmatprep.subr.bf16.mxu0 0
  %2590 = vmatpush2.bf16.msra.mxu0 %v2210
  %2591 = vmatprep.subr.bf16.mxu0 0
  %2592 = vmatpush2.bf16.msra.mxu0 %v2207
  %2593 = vmatprep.subr.bf16.mxu0 0
  %2594 = vmatpush2.bf16.msra.mxu0 %v2204
  %2595 = vmatprep.subr.bf16.mxu0 0
  %2596 = vmatpush2.bf16.msra.mxu0 %v2201
  %2597 = vmatprep.subr.bf16.mxu0 0
  %2598 = vmatpush2.bf16.msra.mxu0 %v2198
  %2599 = vmatprep.mubr.bf16.mxu0 %v1386
  %2600 = vmatmul.mubr.bf16.gmra.mxu0 %v1385
  %v2601 = vpop.f32.mrf.mxu0
  %v2602 = vadd.f32 %v2562, %v2601
  %v2603 = vpop.f32.mrf.mxu0
  %v2604 = vpop.f32.mrf.mxu0
  %v2605 = vpop.f32.mrf.mxu0
  %2606 = vdwg.mxu0
  %v2607 = vadd.s32 %v416, 128
  %v2608 = vadd.s32 %v416, 256
  %vm2609 = vcmp.ge.s32.totalorder %v416, 256
  %vm2610 = vcmp.ge.s32.totalorder %v2607, 256
  %vm2611 = vcmp.ge.s32.totalorder %v2608, 256
  %v2612 = vxor.u32 %v2481, 2147483648
  %v2613 = vxor.u32 %v2483, 2147483648
  %v2614 = vxor.u32 %v2602, 2147483648
  %v2615 = vmul.f32 %v2612, 1.442695
  %v2616 = vpow.pop %v2615
  %v2617 = vmul.f32 %v2613, 1.442695
  %v2618 = vpow.pop %v2617
  %v2619 = vmul.f32 %v2614, 1.442695
  %v2620 = vpow.pop %v2619
  %v2621 = vadd.f32 %v2616, 1.0
  %v2622 = vadd.f32 %v2618, 1.0
  %v2623 = vadd.f32 %v2620, 1.0
  %v2624 = vrcp.pop %v2621
  %v2625 = vmul.f32 1.0, %v2624
  %v2626 = vrcp.pop %v2622
  %v2627 = vmul.f32 1.0, %v2626
  %v2628 = vrcp.pop %v2623
  %v2629 = vmul.f32 1.0, %v2628
  %v2630 = vsel %vm2609, %v2625, %v2481
  %v2631 = vsel %vm2610, %v2627, %v2483
  %v2632 = vsel %vm2611, %v2629, %v2602
  %2633 = vst [vmem:[%s13] sm:$0x3f] %v2630
  %2634 = vst [vmem:[%s13 + $0x8] sm:$0x3f] %v2631
  %2635 = vst [vmem:[%s13 + $0x10] sm:$0x3f] %v2632
  // Predicated region
  $region54: #{denseattention_forward.1} parent=0 // pred_check
    _
  $region55: #{denseattention_forward.1} parent=0 // pred_check_branch
    %2637 = sbr.rel (0) target = $region57
  $region56: #{denseattention_forward.1} parent=0 // pred_region
    _
  $region57: #{denseattention_forward.1} parent=0 // pred_fallthru
    _
  // Predicated region
  $region58: #{denseattention_forward.1} parent=0 // pred_check
    _
  $region59: #{denseattention_forward.1} parent=0 // pred_check_branch
    %2639 = sbr.rel (0) target = $region61
  $region60: #{denseattention_forward.1} parent=0 // pred_region
    _
  $region61: #{denseattention_forward.1} parent=0 // pred_fallthru
    _

</llo_original>
